<compile_context>
chip_gen: v6e
topology: v6e:2x2x1
jax: 0.10.0
libtpu: 0.0.40
codegen_flags: <defaults>
</compile_context>

<pallas_src>
import functools

import jax
import jax.numpy as jnp
from jax.experimental import pallas as pl
from jax.experimental.pallas import tpu as pltpu

# Molecular-graph vocab sizes (as in the pretrain GNN code).
NUM_ATOM_TYPE = 120
NUM_CHIRALITY = 3
NUM_BOND_TYPE = 6
NUM_BOND_DIR = 3


def gin_layer_kernel(dst_ref, msg_ref, h_ref,
                     w1_ref, b1_ref, w2_ref, b2_ref,
                     out_ref, acc_ref, *, tile_n, apply_relu):
    """One GIN layer, tiled: grid = (node_tiles, edge_tiles[reduction])."""
    i = pl.program_id(0)            # node tile (parallel)
    j = pl.program_id(1)            # edge tile (reduction, innermost)

    @pl.when(j == 0)
    def _init():
        acc_ref[...] = jnp.zeros_like(acc_ref)

    tn = acc_ref.shape[0]
    te = dst_ref.shape[1]

    # one-hot[n, e] = (global_node_id(n) == dst[e]); node ids on the sublane
    # axis, edges on the lane axis -> contraction dim is the LHS lane axis.
    row_ids = i * tile_n + jax.lax.broadcasted_iota(jnp.int32, (tn, te), 0)
    dst_b = jnp.broadcast_to(dst_ref[...], (tn, te))
    onehot = (row_ids == dst_b).astype(jnp.bfloat16)                 # [tn, te]
    msg = msg_ref[...].astype(jnp.bfloat16)                          # [te, D]

    acc_ref[...] += jnp.dot(onehot, msg,
                            preferred_element_type=jnp.float32)      # [tn, D]

    @pl.when(j == pl.num_programs(1) - 1)
    def _finalize():
        # GIN self-contribution (eps = 0) then 2-layer MLP (bf16 MXU, f32 acc).
        h = acc_ref[...] + h_ref[...]                                # [tn, D]
        h1 = jnp.dot(h.astype(jnp.bfloat16),
                     w1_ref[...].astype(jnp.bfloat16),
                     preferred_element_type=jnp.float32) + b1_ref[...]
        h1 = jnp.maximum(h1, 0.0)
        out = jnp.dot(h1.astype(jnp.bfloat16),
                      w2_ref[...].astype(jnp.bfloat16),
                      preferred_element_type=jnp.float32) + b2_ref[...]
        if apply_relu:
            out = jnp.maximum(out, 0.0)
        out_ref[...] = out.astype(out_ref.dtype)


def gin_layer(h, dst, msg, w1, b1, w2, b2, *, apply_relu,
              tile_n=128, tile_e=256):
    """Glue: pad to tile multiples, run the tiled Pallas GIN layer."""
    N, D = h.shape
    E = msg.shape[0]
    H = w1.shape[1]

    n_pad = pl.cdiv(N, tile_n) * tile_n
    e_pad = pl.cdiv(E, tile_e) * tile_e
    if n_pad != N:
        h = jnp.pad(h, ((0, n_pad - N), (0, 0)))
    if e_pad != E:
        msg = jnp.pad(msg, ((0, e_pad - E), (0, 0)))
        dst = jnp.pad(dst, (0, e_pad - E), constant_values=-1)  # never matches
    dst2d = dst.astype(jnp.int32).reshape(1, e_pad)

    grid = (n_pad // tile_n, e_pad // tile_e)
    kernel = functools.partial(gin_layer_kernel,
                               tile_n=tile_n, apply_relu=apply_relu)

    out = pl.pallas_call(
        kernel,
        out_shape=jax.ShapeDtypeStruct((n_pad, D), jnp.float32),
        grid_spec=pltpu.PrefetchScalarGridSpec(
            num_scalar_prefetch=0,
            grid=grid,
            in_specs=[
                pl.BlockSpec((1, tile_e), lambda i, j: (0, j)),   # dst (lanes=edges)
                pl.BlockSpec((tile_e, D), lambda i, j: (j, 0)),   # msg edge tile
                pl.BlockSpec((tile_n, D), lambda i, j: (i, 0)),   # h node tile (self term)
                pl.BlockSpec((D, H), lambda i, j: (0, 0)),        # w1 (resident)
                pl.BlockSpec((1, H), lambda i, j: (0, 0)),        # b1
                pl.BlockSpec((H, D), lambda i, j: (0, 0)),        # w2
                pl.BlockSpec((1, D), lambda i, j: (0, 0)),        # b2
            ],
            out_specs=pl.BlockSpec((tile_n, D), lambda i, j: (i, 0)),
            scratch_shapes=[pltpu.VMEM((tile_n, D), jnp.float32)],
        ),
        compiler_params=pltpu.CompilerParams(
            dimension_semantics=("parallel", "arbitrary"),
            vmem_limit_bytes=32 * 1024 * 1024,
        ),
    )(dst2d, msg, h, w1, b1, w2, b2)
    return out[:N]


def init_gnn_params(key, emb_dim, num_layers):
    """Deterministic synthetic parameters for the GIN encoder."""
    params = {}
    keys = iter(jax.random.split(key, 2 + 4 * num_layers))
    s = 0.1
    params["atom_emb"] = s * jax.random.normal(next(keys), (NUM_ATOM_TYPE, emb_dim), jnp.float32)
    params["chir_emb"] = s * jax.random.normal(next(keys), (NUM_CHIRALITY, emb_dim), jnp.float32)
    params["layers"] = []
    for _ in range(num_layers):
        layer = {
            "bond_emb": s * jax.random.normal(next(keys), (NUM_BOND_TYPE, emb_dim), jnp.float32),
            "dir_emb":  s * jax.random.normal(next(keys), (NUM_BOND_DIR, emb_dim), jnp.float32),
            "w1": s * jax.random.normal(next(keys), (emb_dim, 2 * emb_dim), jnp.float32),
            "b1": jnp.zeros((1, 2 * emb_dim), jnp.float32),
            "w2": s * jax.random.normal(next(keys), (2 * emb_dim, emb_dim), jnp.float32),
            "b2": jnp.zeros((1, emb_dim), jnp.float32),
        }
        params["layers"].append(layer)
    return params


@jax.jit
def gnn_forward(params, x, edge_index, edge_attr):
    """GIN encoder: atom embedding -> stacked Pallas GIN layers -> node_rep."""
    # node embedding lookup (glue)
    h = (jnp.take(params["atom_emb"], x[:, 0], axis=0)
         + jnp.take(params["chir_emb"], x[:, 1], axis=0))            # [N, D]
    src = edge_index[0]
    dst = edge_index[1].astype(jnp.int32)
    n_layers = len(params["layers"])
    for li, layer in enumerate(params["layers"]):
        e_emb = (jnp.take(layer["bond_emb"], edge_attr[:, 0], axis=0)
                 + jnp.take(layer["dir_emb"], edge_attr[:, 1], axis=0))   # [E, D]
        # message = gathered source feature + edge embedding (single [E, D] input;
        # no duplicate h_src tensor is shipped to the kernel).
        msg = jnp.take(h, src, axis=0) + e_emb
        # TODO(synk): layer fusion (one pallas_call over all layers with h resident
        # in VMEM) would let the layer-invariant one-hot be built once; kept
        # per-layer here since it needs the whole-graph h resident across tiles.
        h = gin_layer(h, dst, msg,
                      layer["w1"], layer["b1"], layer["w2"], layer["b2"],
                      apply_relu=(li < n_layers - 1))   # last layer: no ReLU
        # TODO(synk): reference GIN applies BatchNorm (training stats) + dropout
        # between layers; omitted here.
    return h


def reactant_stage2_ablation_forward(params, batch_input):
    """Mirrors ReactantStage2_ablation.forward: returns (graph, node_rep, mlabes)."""
    g = batch_input["graph"]
    node_rep = gnn_forward(params, g["x"], g["edge_index"], g["edge_attr"])
    return batch_input["graph"], node_rep, batch_input["mlabes"]


if __name__ == "__main__":
    N, E, D = 250, 500, 128     # nodes, edges, hidden dim (lane-dense: D % 128 == 0)
    NUM_LAYERS = 2

    key = jax.random.PRNGKey(0)
    k1, k2, k3, k4, k5, k6 = jax.random.split(key, 6)

    atom_type = jax.random.randint(k1, (N,), 0, NUM_ATOM_TYPE, dtype=jnp.int32)
    chirality = jax.random.randint(k2, (N,), 0, NUM_CHIRALITY, dtype=jnp.int32)
    x = jnp.stack([atom_type, chirality], axis=1)                    # [N, 2] int

    edge_index = jax.random.randint(k3, (2, E), 0, N, dtype=jnp.int32)    # [2, E]
    bond_type = jax.random.randint(k4, (E,), 0, NUM_BOND_TYPE, dtype=jnp.int32)
    bond_dir = jax.random.randint(k5, (E,), 0, NUM_BOND_DIR, dtype=jnp.int32)
    edge_attr = jnp.stack([bond_type, bond_dir], axis=1)              # [E, 2] int

    mlabes = jax.random.randint(k6, (N,), 0, NUM_ATOM_TYPE, dtype=jnp.int32)

    batch_input = {
        "graph": {"x": x, "edge_index": edge_index, "edge_attr": edge_attr},
        "mlabes": mlabes,
    }

    params = init_gnn_params(jax.random.PRNGKey(42), D, NUM_LAYERS)

    graph_out, node_rep, mlabes_out = reactant_stage2_ablation_forward(params, batch_input)
    jax.block_until_ready(node_rep)
    assert node_rep.shape == (N, D)
    assert bool(jnp.all(jnp.isfinite(node_rep)))
    print("KERNEL_OK")
</pallas_src>

<mosaic_0001>
module attributes {stable_mosaic.version = 11 : i64} {
  func.func @gin_layer_kernel(%arg0: i32, %arg1: i32, %arg2: memref<1x256xi32, #tpu.memory_space<vmem>>, %arg3: memref<256x128xf32, #tpu.memory_space<vmem>>, %arg4: memref<128x128xf32, #tpu.memory_space<vmem>>, %arg5: memref<128x256xf32, #tpu.memory_space<vmem>>, %arg6: memref<1x256xf32, #tpu.memory_space<vmem>>, %arg7: memref<256x128xf32, #tpu.memory_space<vmem>>, %arg8: memref<1x128xf32, #tpu.memory_space<vmem>>, %arg9: memref<128x128xf32, #tpu.memory_space<vmem>>, %arg10: memref<128x128xf32, #tpu.memory_space<vmem>>) attributes {dimension_semantics = [#tpu.dimension_semantics<parallel>, #tpu.dimension_semantics<arbitrary>], iteration_bounds = array<i64: 2, 2>, scalar_prefetch = 0 : i64, scratch_operands = 1 : i64, tpu.core_type = #tpu.core_type<tc>, window_params = [{transform_indices = @transform_0, window_bounds = array<i64: 1, 256>}, {transform_indices = @transform_1, window_bounds = array<i64: 256, 128>}, {transform_indices = @transform_2, window_bounds = array<i64: 128, 128>}, {pipeline_mode = #tpu.pipeline_mode<synchronous>, transform_indices = @transform_3, window_bounds = array<i64: 128, 256>}, {pipeline_mode = #tpu.pipeline_mode<synchronous>, transform_indices = @transform_4, window_bounds = array<i64: 1, 256>}, {pipeline_mode = #tpu.pipeline_mode<synchronous>, transform_indices = @transform_5, window_bounds = array<i64: 256, 128>}, {pipeline_mode = #tpu.pipeline_mode<synchronous>, transform_indices = @transform_6, window_bounds = array<i64: 1, 128>}, {transform_indices = @transform_7, window_bounds = array<i64: 128, 128>}]} {
    %c0_i32 = arith.constant 0 : i32
    %0 = arith.cmpi eq, %arg1, %c0_i32 : i32
    %1 = arith.extui %0 : i1 to i32
    %c0_i32_0 = arith.constant 0 : i32
    %2 = arith.cmpi ne, %1, %c0_i32_0 : i32
    scf.if %2 {
      %cst_9 = arith.constant 0.000000e+00 : f32
      %23 = vector.broadcast %cst_9 : f32 to vector<128x128xf32>
      %c0_10 = arith.constant 0 : index
      %c0_11 = arith.constant 0 : index
      %24 = vector.load %arg10[%c0_10, %c0_11] : memref<128x128xf32, #tpu.memory_space<vmem>>, vector<128x128xf32>
      tpu.vector_store %arg10[%c0_10, %c0_11], %23 {strides = array<i32>} : memref<128x128xf32, #tpu.memory_space<vmem>>, vector<128x128xf32>,
    } else {
    }
    %c128_i32 = arith.constant 128 : i32
    %3 = arith.muli %arg0, %c128_i32 : i32
    %4 = tpu.iota {dimensions = array<i32: 0>} : vector<128x256xi32>
    %5 = vector.broadcast %3 : i32 to vector<128x256xi32>
    %6 = arith.addi %5, %4 : vector<128x256xi32>
    %c0 = arith.constant 0 : index
    %c0_1 = arith.constant 0 : index
    %7 = vector.load %arg2[%c0, %c0_1] : memref<1x256xi32, #tpu.memory_space<vmem>>, vector<1x256xi32>
    %8 = vector.shape_cast %7 : vector<1x256xi32> to vector<1x256xi32>
    %9 = vector.broadcast %8 : vector<1x256xi32> to vector<128x256xi32>
    %10 = arith.cmpi eq, %6, %9 : vector<128x256xi32>
    %11 = arith.extui %10 : vector<128x256xi1> to vector<128x256xi32>
    %12 = arith.sitofp %11 : vector<128x256xi32> to vector<128x256xf32>
    %13 = arith.truncf %12 : vector<128x256xf32> to vector<128x256xbf16>
    %c0_2 = arith.constant 0 : index
    %c0_3 = arith.constant 0 : index
    %14 = vector.load %arg3[%c0_2, %c0_3] : memref<256x128xf32, #tpu.memory_space<vmem>>, vector<256x128xf32>
    %15 = arith.truncf %14 : vector<256x128xf32> to vector<256x128xbf16>
    %c0_4 = arith.constant 0 : index
    %c0_5 = arith.constant 0 : index
    %16 = vector.load %arg10[%c0_4, %c0_5] : memref<128x128xf32, #tpu.memory_space<vmem>>, vector<128x128xf32>
    %cst = arith.constant dense<0.000000e+00> : vector<128x128xf32>
    %17 = tpu.matmul %13, %15, %cst {dimension_numbers = #tpu.dot_dimension_numbers<[1], [0], [0], [1], [0, 0, 1, 1], [], []>} : vector<128x256xbf16>, vector<256x128xbf16>, vector<128x128xf32> -> vector<128x128xf32>
    %18 = arith.addf %16, %17 : vector<128x128xf32>
    %c0_6 = arith.constant 0 : index
    %c0_7 = arith.constant 0 : index
    %19 = vector.load %arg10[%c0_6, %c0_7] : memref<128x128xf32, #tpu.memory_space<vmem>>, vector<128x128xf32>
    tpu.vector_store %arg10[%c0_6, %c0_7], %18 {strides = array<i32>} : memref<128x128xf32, #tpu.memory_space<vmem>>, vector<128x128xf32>,
    %c1_i32 = arith.constant 1 : i32
    %20 = arith.cmpi eq, %arg1, %c1_i32 : i32
    %21 = arith.extui %20 : i1 to i32
    %c0_i32_8 = arith.constant 0 : i32
    %22 = arith.cmpi ne, %21, %c0_i32_8 : i32
    scf.if %22 {
      %c0_9 = arith.constant 0 : index
      %c0_10 = arith.constant 0 : index
      %23 = vector.load %arg10[%c0_9, %c0_10] : memref<128x128xf32, #tpu.memory_space<vmem>>, vector<128x128xf32>
      %c0_11 = arith.constant 0 : index
      %c0_12 = arith.constant 0 : index
      %24 = vector.load %arg4[%c0_11, %c0_12] : memref<128x128xf32, #tpu.memory_space<vmem>>, vector<128x128xf32>
      %25 = arith.addf %23, %24 : vector<128x128xf32>
      %26 = arith.truncf %25 : vector<128x128xf32> to vector<128x128xbf16>
      %c0_13 = arith.constant 0 : index
      %c0_14 = arith.constant 0 : index
      %27 = vector.load %arg5[%c0_13, %c0_14] : memref<128x256xf32, #tpu.memory_space<vmem>>, vector<128x256xf32>
      %28 = arith.truncf %27 : vector<128x256xf32> to vector<128x256xbf16>
      %cst_15 = arith.constant dense<0.000000e+00> : vector<128x256xf32>
      %29 = tpu.matmul %26, %28, %cst_15 {dimension_numbers = #tpu.dot_dimension_numbers<[1], [0], [0], [1], [0, 0, 1, 1], [], []>} : vector<128x128xbf16>, vector<128x256xbf16>, vector<128x256xf32> -> vector<128x256xf32>
      %c0_16 = arith.constant 0 : index
      %c0_17 = arith.constant 0 : index
      %30 = vector.load %arg6[%c0_16, %c0_17] : memref<1x256xf32, #tpu.memory_space<vmem>>, vector<1x256xf32>
      %31 = vector.broadcast %30 : vector<1x256xf32> to vector<128x256xf32>
      %32 = arith.addf %29, %31 : vector<128x256xf32>
      %cst_18 = arith.constant 0.000000e+00 : f32
      %33 = vector.broadcast %cst_18 : f32 to vector<128x256xf32>
      %34 = arith.maximumf %32, %33 : vector<128x256xf32>
      %35 = arith.truncf %34 : vector<128x256xf32> to vector<128x256xbf16>
      %c0_19 = arith.constant 0 : index
      %c0_20 = arith.constant 0 : index
      %36 = vector.load %arg7[%c0_19, %c0_20] : memref<256x128xf32, #tpu.memory_space<vmem>>, vector<256x128xf32>
      %37 = arith.truncf %36 : vector<256x128xf32> to vector<256x128xbf16>
      %cst_21 = arith.constant dense<0.000000e+00> : vector<128x128xf32>
      %38 = tpu.matmul %35, %37, %cst_21 {dimension_numbers = #tpu.dot_dimension_numbers<[1], [0], [0], [1], [0, 0, 1, 1], [], []>} : vector<128x256xbf16>, vector<256x128xbf16>, vector<128x128xf32> -> vector<128x128xf32>
      %c0_22 = arith.constant 0 : index
      %c0_23 = arith.constant 0 : index
      %39 = vector.load %arg8[%c0_22, %c0_23] : memref<1x128xf32, #tpu.memory_space<vmem>>, vector<1x128xf32>
      %40 = vector.broadcast %39 : vector<1x128xf32> to vector<128x128xf32>
      %41 = arith.addf %38, %40 : vector<128x128xf32>
      %cst_24 = arith.constant 0.000000e+00 : f32
      %42 = vector.broadcast %cst_24 : f32 to vector<128x128xf32>
      %43 = arith.maximumf %41, %42 : vector<128x128xf32>
      %c0_25 = arith.constant 0 : index
      %c0_26 = arith.constant 0 : index
      %44 = vector.load %arg9[%c0_25, %c0_26] : memref<128x128xf32, #tpu.memory_space<vmem>>, vector<128x128xf32>
      tpu.vector_store %arg9[%c0_25, %c0_26], %43 {strides = array<i32>} : memref<128x128xf32, #tpu.memory_space<vmem>>, vector<128x128xf32>,
    } else {
    }
    return
  }
  func.func @transform_0(%arg0: i32, %arg1: i32) -> (i32, i32) {
    %c0_i32 = arith.constant 0 : i32
    %c0_i32_0 = arith.constant 0 : i32
    return %c0_i32, %arg1 : i32, i32
  }
  func.func @transform_1(%arg0: i32, %arg1: i32) -> (i32, i32) {
    %c0_i32 = arith.constant 0 : i32
    %c0_i32_0 = arith.constant 0 : i32
    return %arg1, %c0_i32 : i32, i32
  }
  func.func @transform_2(%arg0: i32, %arg1: i32) -> (i32, i32) {
    %c0_i32 = arith.constant 0 : i32
    %c0_i32_0 = arith.constant 0 : i32
    return %arg0, %c0_i32 : i32, i32
  }
  func.func @transform_3(%arg0: i32, %arg1: i32) -> (i32, i32) {
    %c0_i32 = arith.constant 0 : i32
    %c0_i32_0 = arith.constant 0 : i32
    %c0_i32_1 = arith.constant 0 : i32
    return %c0_i32, %c0_i32_0 : i32, i32
  }
  func.func @transform_4(%arg0: i32, %arg1: i32) -> (i32, i32) {
    %c0_i32 = arith.constant 0 : i32
    %c0_i32_0 = arith.constant 0 : i32
    %c0_i32_1 = arith.constant 0 : i32
    return %c0_i32, %c0_i32_0 : i32, i32
  }
  func.func @transform_5(%arg0: i32, %arg1: i32) -> (i32, i32) {
    %c0_i32 = arith.constant 0 : i32
    %c0_i32_0 = arith.constant 0 : i32
    %c0_i32_1 = arith.constant 0 : i32
    return %c0_i32, %c0_i32_0 : i32, i32
  }
  func.func @transform_6(%arg0: i32, %arg1: i32) -> (i32, i32) {
    %c0_i32 = arith.constant 0 : i32
    %c0_i32_0 = arith.constant 0 : i32
    %c0_i32_1 = arith.constant 0 : i32
    return %c0_i32, %c0_i32_0 : i32, i32
  }
  func.func @transform_7(%arg0: i32, %arg1: i32) -> (i32, i32) {
    %c0_i32 = arith.constant 0 : i32
    %c0_i32_0 = arith.constant 0 : i32
    return %arg0, %c0_i32 : i32, i32
  }
}

module attributes {stable_mosaic.version = 11 : i64} {
  func.func @gin_layer_kernel(%arg0: i32, %arg1: i32, %arg2: memref<1x256xi32, #tpu.memory_space<vmem>>, %arg3: memref<256x128xf32, #tpu.memory_space<vmem>>, %arg4: memref<128x128xf32, #tpu.memory_space<vmem>>, %arg5: memref<128x256xf32, #tpu.memory_space<vmem>>, %arg6: memref<1x256xf32, #tpu.memory_space<vmem>>, %arg7: memref<256x128xf32, #tpu.memory_space<vmem>>, %arg8: memref<1x128xf32, #tpu.memory_space<vmem>>, %arg9: memref<128x128xf32, #tpu.memory_space<vmem>>, %arg10: memref<128x128xf32, #tpu.memory_space<vmem>>) attributes {dimension_semantics = [#tpu.dimension_semantics<parallel>, #tpu.dimension_semantics<arbitrary>], iteration_bounds = array<i64: 2, 2>, scalar_prefetch = 0 : i64, scratch_operands = 1 : i64, tpu.core_type = #tpu.core_type<tc>, window_params = [{transform_indices = @transform_0, window_bounds = array<i64: 1, 256>}, {transform_indices = @transform_1, window_bounds = array<i64: 256, 128>}, {transform_indices = @transform_2, window_bounds = array<i64: 128, 128>}, {pipeline_mode = #tpu.pipeline_mode<synchronous>, transform_indices = @transform_3, window_bounds = array<i64: 128, 256>}, {pipeline_mode = #tpu.pipeline_mode<synchronous>, transform_indices = @transform_4, window_bounds = array<i64: 1, 256>}, {pipeline_mode = #tpu.pipeline_mode<synchronous>, transform_indices = @transform_5, window_bounds = array<i64: 256, 128>}, {pipeline_mode = #tpu.pipeline_mode<synchronous>, transform_indices = @transform_6, window_bounds = array<i64: 1, 128>}, {transform_indices = @transform_7, window_bounds = array<i64: 128, 128>}]} {
    %c0_i32 = arith.constant 0 : i32
    %0 = arith.cmpi eq, %arg1, %c0_i32 : i32
    %1 = arith.extui %0 : i1 to i32
    %c0_i32_0 = arith.constant 0 : i32
    %2 = arith.cmpi ne, %1, %c0_i32_0 : i32
    scf.if %2 {
      %cst_9 = arith.constant 0.000000e+00 : f32
      %23 = vector.broadcast %cst_9 : f32 to vector<128x128xf32>
      %c0_10 = arith.constant 0 : index
      %c0_11 = arith.constant 0 : index
      %24 = vector.load %arg10[%c0_10, %c0_11] : memref<128x128xf32, #tpu.memory_space<vmem>>, vector<128x128xf32>
      tpu.vector_store %arg10[%c0_10, %c0_11], %23 {strides = array<i32>} : memref<128x128xf32, #tpu.memory_space<vmem>>, vector<128x128xf32>,
    } else {
    }
    %c128_i32 = arith.constant 128 : i32
    %3 = arith.muli %arg0, %c128_i32 : i32
    %4 = tpu.iota {dimensions = array<i32: 0>} : vector<128x256xi32>
    %5 = vector.broadcast %3 : i32 to vector<128x256xi32>
    %6 = arith.addi %5, %4 : vector<128x256xi32>
    %c0 = arith.constant 0 : index
    %c0_1 = arith.constant 0 : index
    %7 = vector.load %arg2[%c0, %c0_1] : memref<1x256xi32, #tpu.memory_space<vmem>>, vector<1x256xi32>
    %8 = vector.shape_cast %7 : vector<1x256xi32> to vector<1x256xi32>
    %9 = vector.broadcast %8 : vector<1x256xi32> to vector<128x256xi32>
    %10 = arith.cmpi eq, %6, %9 : vector<128x256xi32>
    %11 = arith.extui %10 : vector<128x256xi1> to vector<128x256xi32>
    %12 = arith.sitofp %11 : vector<128x256xi32> to vector<128x256xf32>
    %13 = arith.truncf %12 : vector<128x256xf32> to vector<128x256xbf16>
    %c0_2 = arith.constant 0 : index
    %c0_3 = arith.constant 0 : index
    %14 = vector.load %arg3[%c0_2, %c0_3] : memref<256x128xf32, #tpu.memory_space<vmem>>, vector<256x128xf32>
    %15 = arith.truncf %14 : vector<256x128xf32> to vector<256x128xbf16>
    %c0_4 = arith.constant 0 : index
    %c0_5 = arith.constant 0 : index
    %16 = vector.load %arg10[%c0_4, %c0_5] : memref<128x128xf32, #tpu.memory_space<vmem>>, vector<128x128xf32>
    %cst = arith.constant dense<0.000000e+00> : vector<128x128xf32>
    %17 = tpu.matmul %13, %15, %cst {dimension_numbers = #tpu.dot_dimension_numbers<[1], [0], [0], [1], [0, 0, 1, 1], [], []>} : vector<128x256xbf16>, vector<256x128xbf16>, vector<128x128xf32> -> vector<128x128xf32>
    %18 = arith.addf %16, %17 : vector<128x128xf32>
    %c0_6 = arith.constant 0 : index
    %c0_7 = arith.constant 0 : index
    %19 = vector.load %arg10[%c0_6, %c0_7] : memref<128x128xf32, #tpu.memory_space<vmem>>, vector<128x128xf32>
    tpu.vector_store %arg10[%c0_6, %c0_7], %18 {strides = array<i32>} : memref<128x128xf32, #tpu.memory_space<vmem>>, vector<128x128xf32>,
    %c1_i32 = arith.constant 1 : i32
    %20 = arith.cmpi eq, %arg1, %c1_i32 : i32
    %21 = arith.extui %20 : i1 to i32
    %c0_i32_8 = arith.constant 0 : i32
    %22 = arith.cmpi ne, %21, %c0_i32_8 : i32
    scf.if %22 {
      %c0_9 = arith.constant 0 : index
      %c0_10 = arith.constant 0 : index
      %23 = vector.load %arg10[%c0_9, %c0_10] : memref<128x128xf32, #tpu.memory_space<vmem>>, vector<128x128xf32>
      %c0_11 = arith.constant 0 : index
      %c0_12 = arith.constant 0 : index
      %24 = vector.load %arg4[%c0_11, %c0_12] : memref<128x128xf32, #tpu.memory_space<vmem>>, vector<128x128xf32>
      %25 = arith.addf %23, %24 : vector<128x128xf32>
      %26 = arith.truncf %25 : vector<128x128xf32> to vector<128x128xbf16>
      %c0_13 = arith.constant 0 : index
      %c0_14 = arith.constant 0 : index
      %27 = vector.load %arg5[%c0_13, %c0_14] : memref<128x256xf32, #tpu.memory_space<vmem>>, vector<128x256xf32>
      %28 = arith.truncf %27 : vector<128x256xf32> to vector<128x256xbf16>
      %cst_15 = arith.constant dense<0.000000e+00> : vector<128x256xf32>
      %29 = tpu.matmul %26, %28, %cst_15 {dimension_numbers = #tpu.dot_dimension_numbers<[1], [0], [0], [1], [0, 0, 1, 1], [], []>} : vector<128x128xbf16>, vector<128x256xbf16>, vector<128x256xf32> -> vector<128x256xf32>
      %c0_16 = arith.constant 0 : index
      %c0_17 = arith.constant 0 : index
      %30 = vector.load %arg6[%c0_16, %c0_17] : memref<1x256xf32, #tpu.memory_space<vmem>>, vector<1x256xf32>
      %31 = vector.broadcast %30 : vector<1x256xf32> to vector<128x256xf32>
      %32 = arith.addf %29, %31 : vector<128x256xf32>
      %cst_18 = arith.constant 0.000000e+00 : f32
      %33 = vector.broadcast %cst_18 : f32 to vector<128x256xf32>
      %34 = arith.maximumf %32, %33 : vector<128x256xf32>
      %35 = arith.truncf %34 : vector<128x256xf32> to vector<128x256xbf16>
      %c0_19 = arith.constant 0 : index
      %c0_20 = arith.constant 0 : index
      %36 = vector.load %arg7[%c0_19, %c0_20] : memref<256x128xf32, #tpu.memory_space<vmem>>, vector<256x128xf32>
      %37 = arith.truncf %36 : vector<256x128xf32> to vector<256x128xbf16>
      %cst_21 = arith.constant dense<0.000000e+00> : vector<128x128xf32>
      %38 = tpu.matmul %35, %37, %cst_21 {dimension_numbers = #tpu.dot_dimension_numbers<[1], [0], [0], [1], [0, 0, 1, 1], [], []>} : vector<128x256xbf16>, vector<256x128xbf16>, vector<128x128xf32> -> vector<128x128xf32>
      %c0_22 = arith.constant 0 : index
      %c0_23 = arith.constant 0 : index
      %39 = vector.load %arg8[%c0_22, %c0_23] : memref<1x128xf32, #tpu.memory_space<vmem>>, vector<1x128xf32>
      %40 = vector.broadcast %39 : vector<1x128xf32> to vector<128x128xf32>
      %41 = arith.addf %38, %40 : vector<128x128xf32>
      %c0_24 = arith.constant 0 : index
      %c0_25 = arith.constant 0 : index
      %42 = vector.load %arg9[%c0_24, %c0_25] : memref<128x128xf32, #tpu.memory_space<vmem>>, vector<128x128xf32>
      tpu.vector_store %arg9[%c0_24, %c0_25], %41 {strides = array<i32>} : memref<128x128xf32, #tpu.memory_space<vmem>>, vector<128x128xf32>,
    } else {
    }
    return
  }
  func.func @transform_0(%arg0: i32, %arg1: i32) -> (i32, i32) {
    %c0_i32 = arith.constant 0 : i32
    %c0_i32_0 = arith.constant 0 : i32
    return %c0_i32, %arg1 : i32, i32
  }
  func.func @transform_1(%arg0: i32, %arg1: i32) -> (i32, i32) {
    %c0_i32 = arith.constant 0 : i32
    %c0_i32_0 = arith.constant 0 : i32
    return %arg1, %c0_i32 : i32, i32
  }
  func.func @transform_2(%arg0: i32, %arg1: i32) -> (i32, i32) {
    %c0_i32 = arith.constant 0 : i32
    %c0_i32_0 = arith.constant 0 : i32
    return %arg0, %c0_i32 : i32, i32
  }
  func.func @transform_3(%arg0: i32, %arg1: i32) -> (i32, i32) {
    %c0_i32 = arith.constant 0 : i32
    %c0_i32_0 = arith.constant 0 : i32
    %c0_i32_1 = arith.constant 0 : i32
    return %c0_i32, %c0_i32_0 : i32, i32
  }
  func.func @transform_4(%arg0: i32, %arg1: i32) -> (i32, i32) {
    %c0_i32 = arith.constant 0 : i32
    %c0_i32_0 = arith.constant 0 : i32
    %c0_i32_1 = arith.constant 0 : i32
    return %c0_i32, %c0_i32_0 : i32, i32
  }
  func.func @transform_5(%arg0: i32, %arg1: i32) -> (i32, i32) {
    %c0_i32 = arith.constant 0 : i32
    %c0_i32_0 = arith.constant 0 : i32
    %c0_i32_1 = arith.constant 0 : i32
    return %c0_i32, %c0_i32_0 : i32, i32
  }
  func.func @transform_6(%arg0: i32, %arg1: i32) -> (i32, i32) {
    %c0_i32 = arith.constant 0 : i32
    %c0_i32_0 = arith.constant 0 : i32
    %c0_i32_1 = arith.constant 0 : i32
    return %c0_i32, %c0_i32_0 : i32, i32
  }
  func.func @transform_7(%arg0: i32, %arg1: i32) -> (i32, i32) {
    %c0_i32 = arith.constant 0 : i32
    %c0_i32_0 = arith.constant 0 : i32
    return %arg0, %c0_i32 : i32, i32
  }
}

</mosaic_0001>

<llo_original>
// kernel: gnn_forward.3
$region0: #{gnn_forward.3}
  #allocation0 [shape = 'u32[]', space=smem, size = 0x4, offset = 0x4, fixed_abs, tag = 'smem constant byte address 0x4 - core index']
  #allocation1 [shape = 'u32[144,128]{1,0:T(1,128)}', space=vmem, size = 0x12000, scoped, tag = 'internal scratch']
  #allocation2 [shape = 'f32[128,128]{1,0:T(8,128)}', space=vmem, size = 0x10000, scoped, tag = 'scratch operand']
  %s0 = inlined_call_operand.vmem [shape: s32[1,512], index: 0, kind: input, shape index: {}]
  %s1 = inlined_call_operand.vmem [shape: f32[512,128], index: 1, kind: input, shape index: {}]
  %s2 = inlined_call_operand.vmem [shape: f32[256,128], index: 2, kind: input, shape index: {}]
  %s3 = inlined_call_operand.vmem [shape: f32[128,256], index: 3, kind: input, shape index: {}]
  %s4 = inlined_call_operand.vmem [shape: f32[1,256], index: 4, kind: input, shape index: {}]
  %s5 = inlined_call_operand.vmem [shape: f32[256,128], index: 5, kind: input, shape index: {}]
  %s6 = inlined_call_operand.vmem [shape: f32[1,128], index: 6, kind: input, shape index: {}]
  %s7 = inlined_call_operand.hbm [shape: f32[256,128], index: 7, kind: output, shape index: {}]
  %s8 = sld [smem:[#allocation0]]
  $region69: #{gnn_forward.3} parent=0
    _
  %s10 = ssub.s32 1, %s8
  %s11 = scalar_select 0, %s10, %s8
  $region1: #{gnn_forward.3} parent=0
    #allocation3 [shape = 'u8[131072]{0}', space=vmem, size = 0x20000, scoped, tag = 'output window, operand 0']
    #allocation4 [shape = 's32[2]{0}', space=sflag, size = 0x8, scoped, tag = 'scoped memory for gnn_forward.3']
    %12 = vsyncpa [#allocation4], 0
    %s13 = scalar_lea.sflag [#allocation4], 1
    %14 = vsyncpa %s13, 0
    loop: start=0, step=1, limit=6
    $region2: #{gnn_forward.3} parent=1 // loop_pre_header
      _
    $region3: #{gnn_forward.3} parent=1 // loop_header
      %s16 = sphi 0, %s20
      %p17 = scmp.ge.s32.totalorder %s16, 6
      %s23 = sphi 0, %s35
      %s24 = sphi 0, %s31
      %s25 = sphi 0, %s23
      %s26 = sphi 0, %s24
      %s27 = sphi 0, %s25
      %s28 = sphi 0, %s26
      %s38 = sphi 0, %s40
      %s41 = sphi 0, %s38
      %s42 = sphi 0, %s41
      %s58 = sphi 0, %s42
      %s64 = sphi 0, %s66
      %s67 = sphi 0, %s64
      %s68 = sphi 0, %s67
      %s84 = sphi 0, %s68
      %s90 = sphi 0, %s92
      %s93 = sphi 0, %s90
      %s94 = sphi 0, %s93
      %s110 = sphi 0, %s94
      %s114 = sphi 0, %s114
      %s116 = sphi 0, %s114
      %s117 = sphi 0, %s116
      %s131 = sphi 0, %s117
      %s135 = sphi 0, %s135
      %s137 = sphi 0, %s135
      %s138 = sphi 0, %s137
      %s152 = sphi 0, %s138
      %s156 = sphi 0, %s156
      %s158 = sphi 0, %s156
      %s159 = sphi 0, %s158
      %s173 = sphi 0, %s159
      %s177 = sphi 0, %s177
      %s179 = sphi 0, %s177
      %s180 = sphi 0, %s179
      %s194 = sphi 0, %s180
      %s200 = sphi 0, %s202
      %s203 = sphi 0, %s200
      %s204 = sphi 0, %s203
      %s220 = sphi 0, %s204
    $region4: #{gnn_forward.3} parent=1 // loop_header_branch
      %19 = sbr.rel (%p17) target = $region8
    $region5: #{gnn_forward.3} parent=1 // loop_body
      %s21 = ssub.s32 %s16, 1
      %s22 = ssub.s32 %s16, 2
      %s29 = sadd.s32 1, %s24
      %p30 = scmp.ge.s32.totalorder %s29, 2
      %s31 = scalar_select %p30, 0, %s29
      %s32 = sadd.s32 1, %s23
      %s33 = scalar_select %p30, %s32, %s23
      %p34 = scmp.ge.s32.totalorder %s33, 2
      %s35 = scalar_select %p34, 0, %s33
      %s36 = ssub.s32 %s24, %s31
      %p37 = scmp.eq.s32.totalorder %s36, 0
      %s39 = sadd.s32 %s38, 1
      %s40 = scalar_select %p37, %s38, %s39
      %p43 = pneg %p37
      %p44 = scmp.eq.s32.totalorder %s16, 3
      %p45 = por %p43, %p44
      %p46 = scmp.ne.s32.totalorder %s38, %s41
      %p47 = scmp.eq.s32.totalorder %s16, 0
      %p48 = por %p46, %p47
      %p49 = scmp.ne.s32.totalorder %s38, %s41
      %p50 = scmp.eq.s32.totalorder %s21, 3
      %p51 = por %p49, %p50
      %p52 = scmp.ne.s32.totalorder %s41, %s42
      %p53 = scmp.eq.s32.totalorder %s21, 0
      %p54 = por %p52, %p53
      %p55 = scmp.ne.s32.totalorder %s41, %s42
      %p56 = scmp.eq.s32.totalorder %s22, 3
      %p57 = por %p55, %p56
      %p59 = scmp.ne.s32.totalorder %s42, %s58
      %p60 = scmp.eq.s32.totalorder %s22, 0
      %p61 = por %p59, %p60
      %s62 = ssub.s32 %s24, %s31
      %p63 = scmp.eq.s32.totalorder %s62, 0
      %s65 = sadd.s32 %s64, 1
      %s66 = scalar_select %p63, %s64, %s65
      %p69 = pneg %p63
      %p70 = scmp.eq.s32.totalorder %s16, 3
      %p71 = por %p69, %p70
      %p72 = scmp.ne.s32.totalorder %s64, %s67
      %p73 = scmp.eq.s32.totalorder %s16, 0
      %p74 = por %p72, %p73
      %p75 = scmp.ne.s32.totalorder %s64, %s67
      %p76 = scmp.eq.s32.totalorder %s21, 3
      %p77 = por %p75, %p76
      %p78 = scmp.ne.s32.totalorder %s67, %s68
      %p79 = scmp.eq.s32.totalorder %s21, 0
      %p80 = por %p78, %p79
      %p81 = scmp.ne.s32.totalorder %s67, %s68
      %p82 = scmp.eq.s32.totalorder %s22, 3
      %p83 = por %p81, %p82
      %p85 = scmp.ne.s32.totalorder %s68, %s84
      %p86 = scmp.eq.s32.totalorder %s22, 0
      %p87 = por %p85, %p86
      %s88 = ssub.s32 %s23, %s35
      %p89 = scmp.eq.s32.totalorder %s88, 0
      %s91 = sadd.s32 %s90, 1
      %s92 = scalar_select %p89, %s90, %s91
      %p95 = pneg %p89
      %p96 = scmp.eq.s32.totalorder %s16, 3
      %p97 = por %p95, %p96
      %p98 = scmp.ne.s32.totalorder %s90, %s93
      %p99 = scmp.eq.s32.totalorder %s16, 0
      %p100 = por %p98, %p99
      %p101 = scmp.ne.s32.totalorder %s90, %s93
      %p102 = scmp.eq.s32.totalorder %s21, 3
      %p103 = por %p101, %p102
      %p104 = scmp.ne.s32.totalorder %s93, %s94
      %p105 = scmp.eq.s32.totalorder %s21, 0
      %p106 = por %p104, %p105
      %p107 = scmp.ne.s32.totalorder %s93, %s94
      %p108 = scmp.eq.s32.totalorder %s22, 3
      %p109 = por %p107, %p108
      %p111 = scmp.ne.s32.totalorder %s94, %s110
      %p112 = scmp.eq.s32.totalorder %s22, 0
      %p113 = por %p111, %p112
      %s115 = sadd.s32 %s114, 1
      %p118 = scmp.eq.s32.totalorder %s16, 3
      %p119 = scmp.ne.s32.totalorder %s114, %s116
      %p120 = scmp.eq.s32.totalorder %s16, 0
      %p121 = por %p119, %p120
      %p122 = scmp.ne.s32.totalorder %s114, %s116
      %p123 = scmp.eq.s32.totalorder %s21, 3
      %p124 = por %p122, %p123
      %p125 = scmp.ne.s32.totalorder %s116, %s117
      %p126 = scmp.eq.s32.totalorder %s21, 0
      %p127 = por %p125, %p126
      %p128 = scmp.ne.s32.totalorder %s116, %s117
      %p129 = scmp.eq.s32.totalorder %s22, 3
      %p130 = por %p128, %p129
      %p132 = scmp.ne.s32.totalorder %s117, %s131
      %p133 = scmp.eq.s32.totalorder %s22, 0
      %p134 = por %p132, %p133
      %s136 = sadd.s32 %s135, 1
      %p139 = scmp.eq.s32.totalorder %s16, 3
      %p140 = scmp.ne.s32.totalorder %s135, %s137
      %p141 = scmp.eq.s32.totalorder %s16, 0
      %p142 = por %p140, %p141
      %p143 = scmp.ne.s32.totalorder %s135, %s137
      %p144 = scmp.eq.s32.totalorder %s21, 3
      %p145 = por %p143, %p144
      %p146 = scmp.ne.s32.totalorder %s137, %s138
      %p147 = scmp.eq.s32.totalorder %s21, 0
      %p148 = por %p146, %p147
      %p149 = scmp.ne.s32.totalorder %s137, %s138
      %p150 = scmp.eq.s32.totalorder %s22, 3
      %p151 = por %p149, %p150
      %p153 = scmp.ne.s32.totalorder %s138, %s152
      %p154 = scmp.eq.s32.totalorder %s22, 0
      %p155 = por %p153, %p154
      %s157 = sadd.s32 %s156, 1
      %p160 = scmp.eq.s32.totalorder %s16, 3
      %p161 = scmp.ne.s32.totalorder %s156, %s158
      %p162 = scmp.eq.s32.totalorder %s16, 0
      %p163 = por %p161, %p162
      %p164 = scmp.ne.s32.totalorder %s156, %s158
      %p165 = scmp.eq.s32.totalorder %s21, 3
      %p166 = por %p164, %p165
      %p167 = scmp.ne.s32.totalorder %s158, %s159
      %p168 = scmp.eq.s32.totalorder %s21, 0
      %p169 = por %p167, %p168
      %p170 = scmp.ne.s32.totalorder %s158, %s159
      %p171 = scmp.eq.s32.totalorder %s22, 3
      %p172 = por %p170, %p171
      %p174 = scmp.ne.s32.totalorder %s159, %s173
      %p175 = scmp.eq.s32.totalorder %s22, 0
      %p176 = por %p174, %p175
      %s178 = sadd.s32 %s177, 1
      %p181 = scmp.eq.s32.totalorder %s16, 3
      %p182 = scmp.ne.s32.totalorder %s177, %s179
      %p183 = scmp.eq.s32.totalorder %s16, 0
      %p184 = por %p182, %p183
      %p185 = scmp.ne.s32.totalorder %s177, %s179
      %p186 = scmp.eq.s32.totalorder %s21, 3
      %p187 = por %p185, %p186
      %p188 = scmp.ne.s32.totalorder %s179, %s180
      %p189 = scmp.eq.s32.totalorder %s21, 0
      %p190 = por %p188, %p189
      %p191 = scmp.ne.s32.totalorder %s179, %s180
      %p192 = scmp.eq.s32.totalorder %s22, 3
      %p193 = por %p191, %p192
      %p195 = scmp.ne.s32.totalorder %s180, %s194
      %p196 = scmp.eq.s32.totalorder %s22, 0
      %p197 = por %p195, %p196
      %s198 = ssub.s32 %s23, %s35
      %p199 = scmp.eq.s32.totalorder %s198, 0
      %s201 = sadd.s32 %s200, 1
      %s202 = scalar_select %p199, %s200, %s201
      %p205 = pneg %p199
      %p206 = scmp.eq.s32.totalorder %s16, 3
      %p207 = por %p205, %p206
      %p208 = scmp.ne.s32.totalorder %s200, %s203
      %p209 = scmp.eq.s32.totalorder %s16, 0
      %p210 = por %p208, %p209
      %p211 = scmp.ne.s32.totalorder %s200, %s203
      %p212 = scmp.eq.s32.totalorder %s21, 3
      %p213 = por %p211, %p212
      %p214 = scmp.ne.s32.totalorder %s203, %s204
      %p215 = scmp.eq.s32.totalorder %s21, 0
      %p216 = por %p214, %p215
      %p217 = scmp.ne.s32.totalorder %s203, %s204
      %p218 = scmp.eq.s32.totalorder %s22, 3
      %p219 = por %p217, %p218
      %p221 = scmp.ne.s32.totalorder %s204, %s220
      %p222 = scmp.eq.s32.totalorder %s22, 0
      %p223 = por %p221, %p222
      %p224 = scmp.le.s32.totalorder 1, %s16
      %p225 = scmp.lt.s32.totalorder %s16, 5
      %p226 = pnand %p224, %p225
      %p227 = pneg %p226
      // Predicated region
      $region9: #{gnn_forward.3} parent=5 // pred_check
        _
      $region10: #{gnn_forward.3} parent=5 // pred_check_branch
        %229 = sbr.rel (%p226) target = $region12
      $region11: #{gnn_forward.3} parent=5 // pred_region
        %s230 = ssub.s32 %s16, 1
        // Predicated region
        $region13: #{gnn_forward.3} parent=11 // pred_check
          %p231 = pneg %p127
        $region14: #{gnn_forward.3} parent=11 // pred_check_branch
          %233 = sbr.rel (%p231) target = $region16
        $region15: #{gnn_forward.3} parent=11 // pred_region
          _
        $region16: #{gnn_forward.3} parent=11 // pred_fallthru
          _
        // Predicated region
        $region17: #{gnn_forward.3} parent=11 // pred_check
          %p234 = pneg %p148
        $region18: #{gnn_forward.3} parent=11 // pred_check_branch
          %236 = sbr.rel (%p234) target = $region20
        $region19: #{gnn_forward.3} parent=11 // pred_region
          _
        $region20: #{gnn_forward.3} parent=11 // pred_fallthru
          _
        // Predicated region
        $region21: #{gnn_forward.3} parent=11 // pred_check
          %p237 = pneg %p169
        $region22: #{gnn_forward.3} parent=11 // pred_check_branch
          %239 = sbr.rel (%p237) target = $region24
        $region23: #{gnn_forward.3} parent=11 // pred_region
          _
        $region24: #{gnn_forward.3} parent=11 // pred_fallthru
          _
        // Predicated region
        $region25: #{gnn_forward.3} parent=11 // pred_check
          %p240 = pneg %p190
        $region26: #{gnn_forward.3} parent=11 // pred_check_branch
          %242 = sbr.rel (%p240) target = $region28
        $region27: #{gnn_forward.3} parent=11 // pred_region
          _
        $region28: #{gnn_forward.3} parent=11 // pred_fallthru
          _
      $region12: #{gnn_forward.3} parent=5 // pred_fallthru
        _
      %p243 = scmp.lt.s32.totalorder %s16, 4
      // Predicated region
      $region29: #{gnn_forward.3} parent=5 // pred_check
        %p244 = pneg %p243
      $region30: #{gnn_forward.3} parent=5 // pred_check_branch
        %246 = sbr.rel (%p244) target = $region32
      $region31: #{gnn_forward.3} parent=5 // pred_region
        // Predicated region
        $region33: #{gnn_forward.3} parent=31 // pred_check
          %p247 = pneg %p48
        $region34: #{gnn_forward.3} parent=31 // pred_check_branch
          %249 = sbr.rel (%p247) target = $region36
        $region35: #{gnn_forward.3} parent=31 // pred_region
          %s250 = smul.u32 2, %s24
          %p251 = scmp.lt.s32.totalorder %s250, 3
          %s252 = scalar_select %p251, %s250, 3
          %s253 = scalar_lea.vmem %s0, %s252
          %s254 = smul.u32 2, %s24
        $region36: #{gnn_forward.3} parent=31 // pred_fallthru
          _
        // Predicated region
        $region37: #{gnn_forward.3} parent=31 // pred_check
          %p255 = pneg %p74
        $region38: #{gnn_forward.3} parent=31 // pred_check_branch
          %257 = sbr.rel (%p255) target = $region40
        $region39: #{gnn_forward.3} parent=31 // pred_region
          %s258 = smul.u32 32, %s24
          %p259 = scmp.lt.s32.totalorder %s258, 63
          %s260 = scalar_select %p259, %s258, 63
          %s261 = smul.addr %s260, 8
          %s262 = scalar_lea.vmem %s1, %s261
          %s263 = smul.u32 32, %s24
        $region40: #{gnn_forward.3} parent=31 // pred_fallthru
          _
        // Predicated region
        $region41: #{gnn_forward.3} parent=31 // pred_check
          %p264 = pneg %p100
        $region42: #{gnn_forward.3} parent=31 // pred_check_branch
          %266 = sbr.rel (%p264) target = $region44
        $region43: #{gnn_forward.3} parent=31 // pred_region
          %s267 = smul.u32 16, %s23
          %p268 = scmp.lt.s32.totalorder %s267, 31
          %s269 = scalar_select %p268, %s267, 31
          %s270 = smul.addr %s269, 8
          %s271 = scalar_lea.vmem %s2, %s270
          %s272 = smul.u32 16, %s23
        $region44: #{gnn_forward.3} parent=31 // pred_fallthru
          _
      $region32: #{gnn_forward.3} parent=5 // pred_fallthru
        _
      %p273 = scmp.le.s32.totalorder 1, %s16
      %p274 = scmp.lt.s32.totalorder %s16, 5
      %p275 = pnand %p273, %p274
      %p276 = pneg %p275
      // Predicated region
      $region45: #{gnn_forward.3} parent=5 // pred_check
        _
      $region46: #{gnn_forward.3} parent=5 // pred_check_branch
        %278 = sbr.rel (%p275) target = $region48
      $region47: #{gnn_forward.3} parent=5 // pred_region
        %s279 = ssub.s32 %s16, 1
        %s280 = smul.u32 2, %s26
        %p281 = scmp.lt.s32.totalorder %s280, 3
        %s282 = scalar_select %p281, %s280, 3
        %s283 = scalar_lea.vmem %s0, %s282
        %p284 = pneg %p54
        %p285 = pneg %p51
        %s286 = smul.u32 32, %s26
        %p287 = scmp.lt.s32.totalorder %s286, 63
        %s288 = scalar_select %p287, %s286, 63
        %s289 = smul.addr %s288, 8
        %s290 = scalar_lea.vmem %s1, %s289
        %p291 = pneg %p80
        %p292 = pneg %p77
        %s293 = smul.u32 16, %s25
        %p294 = scmp.lt.s32.totalorder %s293, 31
        %s295 = scalar_select %p294, %s293, 31
        %s296 = smul.addr %s295, 8
        %s297 = scalar_lea.vmem %s2, %s296
        %p298 = pneg %p106
        %p299 = pneg %p103
        %p300 = pneg %p127
        %p301 = pneg %p124
        %p302 = pneg %p148
        %p303 = pneg %p145
        %p304 = pneg %p169
        %p305 = pneg %p166
        %p306 = pneg %p190
        %p307 = pneg %p187
        %p308 = pneg %p216
        %p309 = pneg %p213
        %s310 = sand.u32 %s203, 1
        %s311 = scalar_lea.sflag [#allocation4], %s310
        %s312 = sand.u32 %s203, 1
        %s313 = smul.addr %s312, 128
        %s314 = scalar_lea.vmem [#allocation3], %s313
        %s315 = smul.u32 2, %s26
        %p316 = scmp.lt.s32.totalorder %s315, 3
        %s317 = scalar_select %p316, %s315, 3
        %s318 = scalar_lea.vmem %s0, %s317
        %s319 = smul.u32 2, %s26
        %s320 = smul.u32 32, %s26
        %p321 = scmp.lt.s32.totalorder %s320, 63
        %s322 = scalar_select %p321, %s320, 63
        %s323 = smul.addr %s322, 8
        %s324 = scalar_lea.vmem %s1, %s323
        %s325 = smul.u32 32, %s26
        %s326 = smul.u32 16, %s25
        %p327 = scmp.lt.s32.totalorder %s326, 31
        %s328 = scalar_select %p327, %s326, 31
        %s329 = smul.addr %s328, 8
        %s330 = scalar_lea.vmem %s2, %s329
        %s331 = smul.u32 16, %s25
        %s332 = smul.u32 16, %s25
        %p334 = scmp.eq.s32.totalorder %s26, 0
        // Predicated region
        $region49: #{gnn_forward.3} parent=47 // pred_check
          %p335 = pneg %p334
        $region50: #{gnn_forward.3} parent=47 // pred_check_branch
          %337 = sbr.rel (%p335) target = $region52
        $region51: #{gnn_forward.3} parent=47 // pred_region
          %338 = vst [vmem:[#allocation2] sm:$0xff] 0.0
          %339 = vst [vmem:[#allocation2 + $0x8] sm:$0xff] 0.0
          %340 = vst [vmem:[#allocation2 + $0x10] sm:$0xff] 0.0
          %341 = vst [vmem:[#allocation2 + $0x18] sm:$0xff] 0.0
          %342 = vst [vmem:[#allocation2 + $0x20] sm:$0xff] 0.0
          %343 = vst [vmem:[#allocation2 + $0x28] sm:$0xff] 0.0
          %344 = vst [vmem:[#allocation2 + $0x30] sm:$0xff] 0.0
          %345 = vst [vmem:[#allocation2 + $0x38] sm:$0xff] 0.0
          %346 = vst [vmem:[#allocation2 + $0x40] sm:$0xff] 0.0
          %347 = vst [vmem:[#allocation2 + $0x48] sm:$0xff] 0.0
          %348 = vst [vmem:[#allocation2 + $0x50] sm:$0xff] 0.0
          %349 = vst [vmem:[#allocation2 + $0x58] sm:$0xff] 0.0
          %350 = vst [vmem:[#allocation2 + $0x60] sm:$0xff] 0.0
          %351 = vst [vmem:[#allocation2 + $0x68] sm:$0xff] 0.0
          %352 = vst [vmem:[#allocation2 + $0x70] sm:$0xff] 0.0
          %353 = vst [vmem:[#allocation2 + $0x78] sm:$0xff] 0.0
        $region52: #{gnn_forward.3} parent=47 // pred_fallthru
          _
        %s354 = smul.u32 %s25, 128
        %v355 = vlaneseq
        %v356 = vshrl.u32 %v355, 7
        %v357 = vadd.s32 %v356, 8
        %v358 = vadd.s32 %v356, 16
        %v359 = vadd.s32 %v356, 24
        %v360 = vadd.s32 %v356, 32
        %v361 = vadd.s32 %v356, 40
        %v362 = vadd.s32 %v356, 48
        %v363 = vadd.s32 %v356, 56
        %v364 = vadd.s32 %v356, 64
        %v365 = vadd.s32 %v356, 72
        %v366 = vadd.s32 %v356, 80
        %v367 = vadd.s32 %v356, 88
        %v368 = vadd.s32 %v356, 96
        %v369 = vadd.s32 %v356, 104
        %v370 = vadd.s32 %v356, 112
        %v371 = vadd.s32 %v356, 120
        %v372 = vstv %s354
        %v373 = vadd.s32 %v372, %v356
        %v374 = vadd.s32 %v372, %v357
        %v375 = vadd.s32 %v372, %v358
        %v376 = vadd.s32 %v372, %v359
        %v377 = vadd.s32 %v372, %v360
        %v378 = vadd.s32 %v372, %v361
        %v379 = vadd.s32 %v372, %v362
        %v380 = vadd.s32 %v372, %v363
        %v381 = vadd.s32 %v372, %v364
        %v382 = vadd.s32 %v372, %v365
        %v383 = vadd.s32 %v372, %v366
        %v384 = vadd.s32 %v372, %v367
        %v385 = vadd.s32 %v372, %v368
        %v386 = vadd.s32 %v372, %v369
        %v387 = vadd.s32 %v372, %v370
        %v388 = vadd.s32 %v372, %v371
        %v389 = vld [vmem:[%s318] sm:$0x3]
        %v390 = vlaneseq
        %v391 = vshrl.u32 %v390, 7
        %v392 = vsub.s32 0, %v391
        %v393 = vrot.slane %v389, %v392
        %v394 = vlaneseq
        %v395 = vshrl.u32 %v394, 7
        %v396 = vsub.s32 1, %v395
        %v397 = vrot.slane %v389, %v396
        %vm398 = vcmp.eq.s32.totalorder %v373, %v393
        %vm399 = vcmp.eq.s32.totalorder %v373, %v397
        %vm400 = vcmp.eq.s32.totalorder %v374, %v393
        %vm401 = vcmp.eq.s32.totalorder %v374, %v397
        %vm402 = vcmp.eq.s32.totalorder %v375, %v393
        %vm403 = vcmp.eq.s32.totalorder %v375, %v397
        %vm404 = vcmp.eq.s32.totalorder %v376, %v393
        %vm405 = vcmp.eq.s32.totalorder %v376, %v397
        %vm406 = vcmp.eq.s32.totalorder %v377, %v393
        %vm407 = vcmp.eq.s32.totalorder %v377, %v397
        %vm408 = vcmp.eq.s32.totalorder %v378, %v393
        %vm409 = vcmp.eq.s32.totalorder %v378, %v397
        %vm410 = vcmp.eq.s32.totalorder %v379, %v393
        %vm411 = vcmp.eq.s32.totalorder %v379, %v397
        %vm412 = vcmp.eq.s32.totalorder %v380, %v393
        %vm413 = vcmp.eq.s32.totalorder %v380, %v397
        %vm414 = vcmp.eq.s32.totalorder %v381, %v393
        %vm415 = vcmp.eq.s32.totalorder %v381, %v397
        %vm416 = vcmp.eq.s32.totalorder %v382, %v393
        %vm417 = vcmp.eq.s32.totalorder %v382, %v397
        %vm418 = vcmp.eq.s32.totalorder %v383, %v393
        %vm419 = vcmp.eq.s32.totalorder %v383, %v397
        %vm420 = vcmp.eq.s32.totalorder %v384, %v393
        %vm421 = vcmp.eq.s32.totalorder %v384, %v397
        %vm422 = vcmp.eq.s32.totalorder %v385, %v393
        %vm423 = vcmp.eq.s32.totalorder %v385, %v397
        %vm424 = vcmp.eq.s32.totalorder %v386, %v393
        %vm425 = vcmp.eq.s32.totalorder %v386, %v397
        %vm426 = vcmp.eq.s32.totalorder %v387, %v393
        %vm427 = vcmp.eq.s32.totalorder %v387, %v397
        %vm428 = vcmp.eq.s32.totalorder %v388, %v393
        %vm429 = vcmp.eq.s32.totalorder %v388, %v397
        %v430 = vsel %vm398, 1, 0
        %v431 = vsel %vm399, 1, 0
        %v432 = vsel %vm400, 1, 0
        %v433 = vsel %vm401, 1, 0
        %v434 = vsel %vm402, 1, 0
        %v435 = vsel %vm403, 1, 0
        %v436 = vsel %vm404, 1, 0
        %v437 = vsel %vm405, 1, 0
        %v438 = vsel %vm406, 1, 0
        %v439 = vsel %vm407, 1, 0
        %v440 = vsel %vm408, 1, 0
        %v441 = vsel %vm409, 1, 0
        %v442 = vsel %vm410, 1, 0
        %v443 = vsel %vm411, 1, 0
        %v444 = vsel %vm412, 1, 0
        %v445 = vsel %vm413, 1, 0
        %v446 = vsel %vm414, 1, 0
        %v447 = vsel %vm415, 1, 0
        %v448 = vsel %vm416, 1, 0
        %v449 = vsel %vm417, 1, 0
        %v450 = vsel %vm418, 1, 0
        %v451 = vsel %vm419, 1, 0
        %v452 = vsel %vm420, 1, 0
        %v453 = vsel %vm421, 1, 0
        %v454 = vsel %vm422, 1, 0
        %v455 = vsel %vm423, 1, 0
        %v456 = vsel %vm424, 1, 0
        %v457 = vsel %vm425, 1, 0
        %v458 = vsel %vm426, 1, 0
        %v459 = vsel %vm427, 1, 0
        %v460 = vsel %vm428, 1, 0
        %v461 = vsel %vm429, 1, 0
        %v462 = vcvt.s32.f32 %v430
        %v463 = vcvt.s32.f32 %v431
        %v464 = vcvt.s32.f32 %v432
        %v465 = vcvt.s32.f32 %v433
        %v466 = vcvt.s32.f32 %v434
        %v467 = vcvt.s32.f32 %v435
        %v468 = vcvt.s32.f32 %v436
        %v469 = vcvt.s32.f32 %v437
        %v470 = vcvt.s32.f32 %v438
        %v471 = vcvt.s32.f32 %v439
        %v472 = vcvt.s32.f32 %v440
        %v473 = vcvt.s32.f32 %v441
        %v474 = vcvt.s32.f32 %v442
        %v475 = vcvt.s32.f32 %v443
        %v476 = vcvt.s32.f32 %v444
        %v477 = vcvt.s32.f32 %v445
        %v478 = vcvt.s32.f32 %v446
        %v479 = vcvt.s32.f32 %v447
        %v480 = vcvt.s32.f32 %v448
        %v481 = vcvt.s32.f32 %v449
        %v482 = vcvt.s32.f32 %v450
        %v483 = vcvt.s32.f32 %v451
        %v484 = vcvt.s32.f32 %v452
        %v485 = vcvt.s32.f32 %v453
        %v486 = vcvt.s32.f32 %v454
        %v487 = vcvt.s32.f32 %v455
        %v488 = vcvt.s32.f32 %v456
        %v489 = vcvt.s32.f32 %v457
        %v490 = vcvt.s32.f32 %v458
        %v491 = vcvt.s32.f32 %v459
        %v492 = vcvt.s32.f32 %v460
        %v493 = vcvt.s32.f32 %v461
        %v494 = vpack.c.bf16 %v464, %v462
        %v495 = vpack.c.bf16 %v465, %v463
        %v496 = vpack.c.bf16 %v468, %v466
        %v497 = vpack.c.bf16 %v469, %v467
        %v498 = vpack.c.bf16 %v472, %v470
        %v499 = vpack.c.bf16 %v473, %v471
        %v500 = vpack.c.bf16 %v476, %v474
        %v501 = vpack.c.bf16 %v477, %v475
        %v502 = vpack.c.bf16 %v480, %v478
        %v503 = vpack.c.bf16 %v481, %v479
        %v504 = vpack.c.bf16 %v484, %v482
        %v505 = vpack.c.bf16 %v485, %v483
        %v506 = vpack.c.bf16 %v488, %v486
        %v507 = vpack.c.bf16 %v489, %v487
        %v508 = vpack.c.bf16 %v492, %v490
        %v509 = vpack.c.bf16 %v493, %v491
        %v510 = vld [vmem:[%s324] sm:$0xff]
        %v511 = vld [vmem:[%s324 + $0x8] sm:$0xff]
        %v512 = vld [vmem:[%s324 + $0x10] sm:$0xff]
        %v513 = vld [vmem:[%s324 + $0x18] sm:$0xff]
        %v514 = vld [vmem:[%s324 + $0x20] sm:$0xff]
        %v515 = vld [vmem:[%s324 + $0x28] sm:$0xff]
        %v516 = vld [vmem:[%s324 + $0x30] sm:$0xff]
        %v517 = vld [vmem:[%s324 + $0x38] sm:$0xff]
        %v518 = vld [vmem:[%s324 + $0x40] sm:$0xff]
        %v519 = vld [vmem:[%s324 + $0x48] sm:$0xff]
        %v520 = vld [vmem:[%s324 + $0x50] sm:$0xff]
        %v521 = vld [vmem:[%s324 + $0x58] sm:$0xff]
        %v522 = vld [vmem:[%s324 + $0x60] sm:$0xff]
        %v523 = vld [vmem:[%s324 + $0x68] sm:$0xff]
        %v524 = vld [vmem:[%s324 + $0x70] sm:$0xff]
        %v525 = vld [vmem:[%s324 + $0x78] sm:$0xff]
        %v526 = vld [vmem:[%s324 + $0x80] sm:$0xff]
        %v527 = vld [vmem:[%s324 + $0x88] sm:$0xff]
        %v528 = vld [vmem:[%s324 + $0x90] sm:$0xff]
        %v529 = vld [vmem:[%s324 + $0x98] sm:$0xff]
        %v530 = vld [vmem:[%s324 + $0xa0] sm:$0xff]
        %v531 = vld [vmem:[%s324 + $0xa8] sm:$0xff]
        %v532 = vld [vmem:[%s324 + $0xb0] sm:$0xff]
        %v533 = vld [vmem:[%s324 + $0xb8] sm:$0xff]
        %v534 = vld [vmem:[%s324 + $0xc0] sm:$0xff]
        %v535 = vld [vmem:[%s324 + $0xc8] sm:$0xff]
        %v536 = vld [vmem:[%s324 + $0xd0] sm:$0xff]
        %v537 = vld [vmem:[%s324 + $0xd8] sm:$0xff]
        %v538 = vld [vmem:[%s324 + $0xe0] sm:$0xff]
        %v539 = vld [vmem:[%s324 + $0xe8] sm:$0xff]
        %v540 = vld [vmem:[%s324 + $0xf0] sm:$0xff]
        %v541 = vld [vmem:[%s324 + $0xf8] sm:$0xff]
        %v542 = vpack.c.bf16 %v511, %v510
        %v543 = vpack.c.bf16 %v513, %v512
        %v544 = vpack.c.bf16 %v515, %v514
        %v545 = vpack.c.bf16 %v517, %v516
        %v546 = vpack.c.bf16 %v519, %v518
        %v547 = vpack.c.bf16 %v521, %v520
        %v548 = vpack.c.bf16 %v523, %v522
        %v549 = vpack.c.bf16 %v525, %v524
        %v550 = vpack.c.bf16 %v527, %v526
        %v551 = vpack.c.bf16 %v529, %v528
        %v552 = vpack.c.bf16 %v531, %v530
        %v553 = vpack.c.bf16 %v533, %v532
        %v554 = vpack.c.bf16 %v535, %v534
        %v555 = vpack.c.bf16 %v537, %v536
        %v556 = vpack.c.bf16 %v539, %v538
        %v557 = vpack.c.bf16 %v541, %v540
        %v558 = vld [vmem:[#allocation2] sm:$0xff]
        %v559 = vld [vmem:[#allocation2 + $0x8] sm:$0xff]
        %v560 = vld [vmem:[#allocation2 + $0x10] sm:$0xff]
        %v561 = vld [vmem:[#allocation2 + $0x18] sm:$0xff]
        %v562 = vld [vmem:[#allocation2 + $0x20] sm:$0xff]
        %v563 = vld [vmem:[#allocation2 + $0x28] sm:$0xff]
        %v564 = vld [vmem:[#allocation2 + $0x30] sm:$0xff]
        %v565 = vld [vmem:[#allocation2 + $0x38] sm:$0xff]
        %v566 = vld [vmem:[#allocation2 + $0x40] sm:$0xff]
        %v567 = vld [vmem:[#allocation2 + $0x48] sm:$0xff]
        %v568 = vld [vmem:[#allocation2 + $0x50] sm:$0xff]
        %v569 = vld [vmem:[#allocation2 + $0x58] sm:$0xff]
        %v570 = vld [vmem:[#allocation2 + $0x60] sm:$0xff]
        %v571 = vld [vmem:[#allocation2 + $0x68] sm:$0xff]
        %v572 = vld [vmem:[#allocation2 + $0x70] sm:$0xff]
        %v573 = vld [vmem:[#allocation2 + $0x78] sm:$0xff]
        %574 = vmatprep.subr.bf16.mxu0 0
        %575 = vmatpush1.bf16.msra.mxu0 %v549
        %576 = vmatprep.subr.bf16.mxu0 0
        %577 = vmatpush1.bf16.msra.mxu0 %v548
        %578 = vmatprep.subr.bf16.mxu0 0
        %579 = vmatpush1.bf16.msra.mxu0 %v547
        %580 = vmatprep.subr.bf16.mxu0 0
        %581 = vmatpush1.bf16.msra.mxu0 %v546
        %582 = vmatprep.subr.bf16.mxu0 0
        %583 = vmatpush1.bf16.msra.mxu0 %v545
        %584 = vmatprep.subr.bf16.mxu0 0
        %585 = vmatpush1.bf16.msra.mxu0 %v544
        %586 = vmatprep.subr.bf16.mxu0 0
        %587 = vmatpush1.bf16.msra.mxu0 %v543
        %588 = vmatprep.subr.bf16.mxu0 0
        %589 = vmatpush1.bf16.msra.mxu0 %v542
        %590 = vmatprep.subr.bf16.mxu0 0
        %591 = vmatpush2.bf16.msra.mxu0 %v557
        %592 = vmatprep.subr.bf16.mxu0 0
        %593 = vmatpush2.bf16.msra.mxu0 %v556
        %594 = vmatprep.subr.bf16.mxu0 0
        %595 = vmatpush2.bf16.msra.mxu0 %v555
        %596 = vmatprep.subr.bf16.mxu0 0
        %597 = vmatpush2.bf16.msra.mxu0 %v554
        %598 = vmatprep.subr.bf16.mxu0 0
        %599 = vmatpush2.bf16.msra.mxu0 %v553
        %600 = vmatprep.subr.bf16.mxu0 0
        %601 = vmatpush2.bf16.msra.mxu0 %v552
        %602 = vmatprep.subr.bf16.mxu0 0
        %603 = vmatpush2.bf16.msra.mxu0 %v551
        %604 = vmatprep.subr.bf16.mxu0 0
        %605 = vmatpush2.bf16.msra.mxu0 %v550
        %606 = vmatprep.mubr.bf16.mxu0 %v495
        %607 = vmatmul.mubr.bf16.gmra.mxu0 %v494
        %v608 = vpop.f32.mrf.mxu0
        %v609 = vadd.f32 0.0, %v608
        %v610 = vpop.f32.mrf.mxu0
        %v611 = vpop.f32.mrf.mxu0
        %v612 = vadd.f32 0.0, %v611
        %v613 = vpop.f32.mrf.mxu0
        %614 = vmatprep.mubr.bf16.mxu0 %v497
        %615 = vmatmul.mubr.bf16.gmra.mxu0 %v496
        %v616 = vpop.f32.mrf.mxu0
        %v617 = vadd.f32 0.0, %v616
        %v618 = vpop.f32.mrf.mxu0
        %v619 = vpop.f32.mrf.mxu0
        %v620 = vadd.f32 0.0, %v619
        %v621 = vpop.f32.mrf.mxu0
        %622 = vmatprep.mubr.bf16.mxu0 %v499
        %623 = vmatmul.mubr.bf16.gmra.mxu0 %v498
        %v624 = vpop.f32.mrf.mxu0
        %v625 = vadd.f32 0.0, %v624
        %v626 = vpop.f32.mrf.mxu0
        %v627 = vpop.f32.mrf.mxu0
        %v628 = vadd.f32 0.0, %v627
        %v629 = vpop.f32.mrf.mxu0
        %630 = vmatprep.mubr.bf16.mxu0 %v501
        %631 = vmatmul.mubr.bf16.gmra.mxu0 %v500
        %v632 = vpop.f32.mrf.mxu0
        %v633 = vadd.f32 0.0, %v632
        %v634 = vpop.f32.mrf.mxu0
        %v635 = vpop.f32.mrf.mxu0
        %v636 = vadd.f32 0.0, %v635
        %v637 = vpop.f32.mrf.mxu0
        %638 = vmatprep.mubr.bf16.mxu0 %v503
        %639 = vmatmul.mubr.bf16.gmra.mxu0 %v502
        %v640 = vpop.f32.mrf.mxu0
        %v641 = vadd.f32 0.0, %v640
        %v642 = vpop.f32.mrf.mxu0
        %v643 = vpop.f32.mrf.mxu0
        %v644 = vadd.f32 0.0, %v643
        %v645 = vpop.f32.mrf.mxu0
        %646 = vmatprep.mubr.bf16.mxu0 %v505
        %647 = vmatmul.mubr.bf16.gmra.mxu0 %v504
        %v648 = vpop.f32.mrf.mxu0
        %v649 = vadd.f32 0.0, %v648
        %v650 = vpop.f32.mrf.mxu0
        %v651 = vpop.f32.mrf.mxu0
        %v652 = vadd.f32 0.0, %v651
        %v653 = vpop.f32.mrf.mxu0
        %654 = vmatprep.mubr.bf16.mxu0 %v507
        %655 = vmatmul.mubr.bf16.gmra.mxu0 %v506
        %v656 = vpop.f32.mrf.mxu0
        %v657 = vadd.f32 0.0, %v656
        %v658 = vpop.f32.mrf.mxu0
        %v659 = vpop.f32.mrf.mxu0
        %v660 = vadd.f32 0.0, %v659
        %v661 = vpop.f32.mrf.mxu0
        %662 = vmatprep.mubr.bf16.mxu0 %v509
        %663 = vmatmul.mubr.bf16.gmra.mxu0 %v508
        %v664 = vpop.f32.mrf.mxu0
        %v665 = vadd.f32 0.0, %v664
        %v666 = vpop.f32.mrf.mxu0
        %v667 = vpop.f32.mrf.mxu0
        %v668 = vadd.f32 0.0, %v667
        %v669 = vpop.f32.mrf.mxu0
        %670 = vdwg.mxu0
        %v671 = vadd.f32 %v558, %v609
        %v672 = vadd.f32 %v559, %v612
        %v673 = vadd.f32 %v560, %v617
        %v674 = vadd.f32 %v561, %v620
        %v675 = vadd.f32 %v562, %v625
        %v676 = vadd.f32 %v563, %v628
        %v677 = vadd.f32 %v564, %v633
        %v678 = vadd.f32 %v565, %v636
        %v679 = vadd.f32 %v566, %v641
        %v680 = vadd.f32 %v567, %v644
        %v681 = vadd.f32 %v568, %v649
        %v682 = vadd.f32 %v569, %v652
        %v683 = vadd.f32 %v570, %v657
        %v684 = vadd.f32 %v571, %v660
        %v685 = vadd.f32 %v572, %v665
        %v686 = vadd.f32 %v573, %v668
        %687 = vst [vmem:[#allocation2] sm:$0xff] %v671
        %688 = vst [vmem:[#allocation2 + $0x8] sm:$0xff] %v672
        %689 = vst [vmem:[#allocation2 + $0x10] sm:$0xff] %v673
        %690 = vst [vmem:[#allocation2 + $0x18] sm:$0xff] %v674
        %691 = vst [vmem:[#allocation2 + $0x20] sm:$0xff] %v675
        %692 = vst [vmem:[#allocation2 + $0x28] sm:$0xff] %v676
        %693 = vst [vmem:[#allocation2 + $0x30] sm:$0xff] %v677
        %694 = vst [vmem:[#allocation2 + $0x38] sm:$0xff] %v678
        %695 = vst [vmem:[#allocation2 + $0x40] sm:$0xff] %v679
        %696 = vst [vmem:[#allocation2 + $0x48] sm:$0xff] %v680
        %697 = vst [vmem:[#allocation2 + $0x50] sm:$0xff] %v681
        %698 = vst [vmem:[#allocation2 + $0x58] sm:$0xff] %v682
        %699 = vst [vmem:[#allocation2 + $0x60] sm:$0xff] %v683
        %700 = vst [vmem:[#allocation2 + $0x68] sm:$0xff] %v684
        %701 = vst [vmem:[#allocation2 + $0x70] sm:$0xff] %v685
        %702 = vst [vmem:[#allocation2 + $0x78] sm:$0xff] %v686
        %p703 = scmp.eq.s32.totalorder %s26, 1
        // Predicated region
        $region53: #{gnn_forward.3} parent=47 // pred_check
          %p704 = pneg %p703
        $region54: #{gnn_forward.3} parent=47 // pred_check_branch
          %706 = sbr.rel (%p704) target = $region56
        $region55: #{gnn_forward.3} parent=47 // pred_region
          %v707 = vld [vmem:[#allocation2] sm:$0xff]
          %v708 = vld [vmem:[#allocation2 + $0x8] sm:$0xff]
          %v709 = vld [vmem:[#allocation2 + $0x10] sm:$0xff]
          %v710 = vld [vmem:[#allocation2 + $0x18] sm:$0xff]
          %v711 = vld [vmem:[#allocation2 + $0x20] sm:$0xff]
          %v712 = vld [vmem:[#allocation2 + $0x28] sm:$0xff]
          %v713 = vld [vmem:[#allocation2 + $0x30] sm:$0xff]
          %v714 = vld [vmem:[#allocation2 + $0x38] sm:$0xff]
          %v715 = vld [vmem:[#allocation2 + $0x40] sm:$0xff]
          %v716 = vld [vmem:[#allocation2 + $0x48] sm:$0xff]
          %v717 = vld [vmem:[#allocation2 + $0x50] sm:$0xff]
          %v718 = vld [vmem:[#allocation2 + $0x58] sm:$0xff]
          %v719 = vld [vmem:[#allocation2 + $0x60] sm:$0xff]
          %v720 = vld [vmem:[#allocation2 + $0x68] sm:$0xff]
          %v721 = vld [vmem:[#allocation2 + $0x70] sm:$0xff]
          %v722 = vld [vmem:[#allocation2 + $0x78] sm:$0xff]
          %v723 = vld [vmem:[%s330] sm:$0xff]
          %v724 = vld [vmem:[%s330 + $0x8] sm:$0xff]
          %v725 = vld [vmem:[%s330 + $0x10] sm:$0xff]
          %v726 = vld [vmem:[%s330 + $0x18] sm:$0xff]
          %v727 = vld [vmem:[%s330 + $0x20] sm:$0xff]
          %v728 = vld [vmem:[%s330 + $0x28] sm:$0xff]
          %v729 = vld [vmem:[%s330 + $0x30] sm:$0xff]
          %v730 = vld [vmem:[%s330 + $0x38] sm:$0xff]
          %v731 = vld [vmem:[%s330 + $0x40] sm:$0xff]
          %v732 = vld [vmem:[%s330 + $0x48] sm:$0xff]
          %v733 = vld [vmem:[%s330 + $0x50] sm:$0xff]
          %v734 = vld [vmem:[%s330 + $0x58] sm:$0xff]
          %v735 = vld [vmem:[%s330 + $0x60] sm:$0xff]
          %v736 = vld [vmem:[%s330 + $0x68] sm:$0xff]
          %v737 = vld [vmem:[%s330 + $0x70] sm:$0xff]
          %v738 = vld [vmem:[%s330 + $0x78] sm:$0xff]
          %v739 = vadd.f32 %v707, %v723
          %v740 = vadd.f32 %v708, %v724
          %v741 = vadd.f32 %v709, %v725
          %v742 = vadd.f32 %v710, %v726
          %v743 = vadd.f32 %v711, %v727
          %v744 = vadd.f32 %v712, %v728
          %v745 = vadd.f32 %v713, %v729
          %v746 = vadd.f32 %v714, %v730
          %v747 = vadd.f32 %v715, %v731
          %v748 = vadd.f32 %v716, %v732
          %v749 = vadd.f32 %v717, %v733
          %v750 = vadd.f32 %v718, %v734
          %v751 = vadd.f32 %v719, %v735
          %v752 = vadd.f32 %v720, %v736
          %v753 = vadd.f32 %v721, %v737
          %v754 = vadd.f32 %v722, %v738
          %v755 = vpack.c.bf16 %v740, %v739
          %v756 = vpack.c.bf16 %v742, %v741
          %v757 = vpack.c.bf16 %v744, %v743
          %v758 = vpack.c.bf16 %v746, %v745
          %v759 = vpack.c.bf16 %v748, %v747
          %v760 = vpack.c.bf16 %v750, %v749
          %v761 = vpack.c.bf16 %v752, %v751
          %v762 = vpack.c.bf16 %v754, %v753
          %v763 = vld [vmem:[%s3] sm:$0xff]
          %v764 = vld [vmem:[%s3 + $0x8] sm:$0xff]
          %v765 = vld [vmem:[%s3 + $0x10] sm:$0xff]
          %v766 = vld [vmem:[%s3 + $0x18] sm:$0xff]
          %v767 = vld [vmem:[%s3 + $0x20] sm:$0xff]
          %v768 = vld [vmem:[%s3 + $0x28] sm:$0xff]
          %v769 = vld [vmem:[%s3 + $0x30] sm:$0xff]
          %v770 = vld [vmem:[%s3 + $0x38] sm:$0xff]
          %v771 = vld [vmem:[%s3 + $0x40] sm:$0xff]
          %v772 = vld [vmem:[%s3 + $0x48] sm:$0xff]
          %v773 = vld [vmem:[%s3 + $0x50] sm:$0xff]
          %v774 = vld [vmem:[%s3 + $0x58] sm:$0xff]
          %v775 = vld [vmem:[%s3 + $0x60] sm:$0xff]
          %v776 = vld [vmem:[%s3 + $0x68] sm:$0xff]
          %v777 = vld [vmem:[%s3 + $0x70] sm:$0xff]
          %v778 = vld [vmem:[%s3 + $0x78] sm:$0xff]
          %v779 = vld [vmem:[%s3 + $0x80] sm:$0xff]
          %v780 = vld [vmem:[%s3 + $0x88] sm:$0xff]
          %v781 = vld [vmem:[%s3 + $0x90] sm:$0xff]
          %v782 = vld [vmem:[%s3 + $0x98] sm:$0xff]
          %v783 = vld [vmem:[%s3 + $0xa0] sm:$0xff]
          %v784 = vld [vmem:[%s3 + $0xa8] sm:$0xff]
          %v785 = vld [vmem:[%s3 + $0xb0] sm:$0xff]
          %v786 = vld [vmem:[%s3 + $0xb8] sm:$0xff]
          %v787 = vld [vmem:[%s3 + $0xc0] sm:$0xff]
          %v788 = vld [vmem:[%s3 + $0xc8] sm:$0xff]
          %v789 = vld [vmem:[%s3 + $0xd0] sm:$0xff]
          %v790 = vld [vmem:[%s3 + $0xd8] sm:$0xff]
          %v791 = vld [vmem:[%s3 + $0xe0] sm:$0xff]
          %v792 = vld [vmem:[%s3 + $0xe8] sm:$0xff]
          %v793 = vld [vmem:[%s3 + $0xf0] sm:$0xff]
          %v794 = vld [vmem:[%s3 + $0xf8] sm:$0xff]
          %v795 = vpack.c.bf16 %v765, %v763
          %v796 = vpack.c.bf16 %v766, %v764
          %v797 = vpack.c.bf16 %v769, %v767
          %v798 = vpack.c.bf16 %v770, %v768
          %v799 = vpack.c.bf16 %v773, %v771
          %v800 = vpack.c.bf16 %v774, %v772
          %v801 = vpack.c.bf16 %v777, %v775
          %v802 = vpack.c.bf16 %v778, %v776
          %v803 = vpack.c.bf16 %v781, %v779
          %v804 = vpack.c.bf16 %v782, %v780
          %v805 = vpack.c.bf16 %v785, %v783
          %v806 = vpack.c.bf16 %v786, %v784
          %v807 = vpack.c.bf16 %v789, %v787
          %v808 = vpack.c.bf16 %v790, %v788
          %v809 = vpack.c.bf16 %v793, %v791
          %v810 = vpack.c.bf16 %v794, %v792
          %v811 = vld [vmem:[%s4] sm:$0x3]
          %v813 = vlaneseq
          %v814 = vshrl.u32 %v813, 7
          %v815 = vsub.s32 0, %v814
          %v816 = vrot.slane %v811, %v815
          %v817 = vlaneseq
          %v818 = vshrl.u32 %v817, 7
          %v819 = vsub.s32 1, %v818
          %v820 = vrot.slane %v811, %v819
          %823 = vmatprep.subr.bf16.mxu0 %v810
          %824 = vmatpush1.bf16.msra.mxu0 %v809
          %825 = vmatprep.subr.bf16.mxu0 %v808
          %826 = vmatpush1.bf16.msra.mxu0 %v807
          %827 = vmatprep.subr.bf16.mxu0 %v806
          %828 = vmatpush1.bf16.msra.mxu0 %v805
          %829 = vmatprep.subr.bf16.mxu0 %v804
          %830 = vmatpush1.bf16.msra.mxu0 %v803
          %831 = vmatprep.subr.bf16.mxu0 %v802
          %832 = vmatpush1.bf16.msra.mxu0 %v801
          %833 = vmatprep.subr.bf16.mxu0 %v800
          %834 = vmatpush1.bf16.msra.mxu0 %v799
          %835 = vmatprep.subr.bf16.mxu0 %v798
          %836 = vmatpush1.bf16.msra.mxu0 %v797
          %837 = vmatprep.subr.bf16.mxu0 %v796
          %838 = vmatpush1.bf16.msra.mxu0 %v795
          %839 = vmatprep.subr.bf16.mxu0 0
          %840 = vmatpush2.bf16.msra.mxu0 0
          %841 = vmatprep.subr.bf16.mxu0 0
          %842 = vmatpush2.bf16.msra.mxu0 0
          %843 = vmatprep.subr.bf16.mxu0 0
          %844 = vmatpush2.bf16.msra.mxu0 0
          %845 = vmatprep.subr.bf16.mxu0 0
          %846 = vmatpush2.bf16.msra.mxu0 0
          %847 = vmatprep.subr.bf16.mxu0 0
          %848 = vmatpush2.bf16.msra.mxu0 0
          %849 = vmatprep.subr.bf16.mxu0 0
          %850 = vmatpush2.bf16.msra.mxu0 0
          %851 = vmatprep.subr.bf16.mxu0 0
          %852 = vmatpush2.bf16.msra.mxu0 0
          %853 = vmatprep.subr.bf16.mxu0 0
          %854 = vmatpush2.bf16.msra.mxu0 0
          %855 = vmatprep.mubr.bf16.mxu0 0
          %856 = vmatmul.mubr.bf16.gmra.mxu0 %v755
          %v857 = vpop.f32.mrf.mxu0
          %v858 = vadd.f32 %v816, %v857
          %v859 = vpop.f32.mrf.mxu0
          %v860 = vadd.f32 %v820, %v859
          %v861 = vpop.f32.mrf.mxu0
          %v862 = vadd.f32 %v816, %v861
          %v863 = vpop.f32.mrf.mxu0
          %v864 = vadd.f32 %v820, %v863
          %865 = vmatprep.mubr.bf16.mxu0 0
          %866 = vmatmul.mubr.bf16.gmra.mxu0 %v756
          %v867 = vpop.f32.mrf.mxu0
          %v868 = vadd.f32 %v816, %v867
          %v869 = vpop.f32.mrf.mxu0
          %v870 = vadd.f32 %v820, %v869
          %v871 = vpop.f32.mrf.mxu0
          %v872 = vadd.f32 %v816, %v871
          %v873 = vpop.f32.mrf.mxu0
          %v874 = vadd.f32 %v820, %v873
          %875 = vmatprep.mubr.bf16.mxu0 0
          %876 = vmatmul.mubr.bf16.gmra.mxu0 %v757
          %v877 = vpop.f32.mrf.mxu0
          %v878 = vadd.f32 %v816, %v877
          %v879 = vpop.f32.mrf.mxu0
          %v880 = vadd.f32 %v820, %v879
          %v881 = vpop.f32.mrf.mxu0
          %v882 = vadd.f32 %v816, %v881
          %v883 = vpop.f32.mrf.mxu0
          %v884 = vadd.f32 %v820, %v883
          %885 = vmatprep.mubr.bf16.mxu0 0
          %886 = vmatmul.mubr.bf16.gmra.mxu0 %v758
          %v887 = vpop.f32.mrf.mxu0
          %v888 = vadd.f32 %v816, %v887
          %v889 = vpop.f32.mrf.mxu0
          %v890 = vadd.f32 %v820, %v889
          %v891 = vpop.f32.mrf.mxu0
          %v892 = vadd.f32 %v816, %v891
          %v893 = vpop.f32.mrf.mxu0
          %v894 = vadd.f32 %v820, %v893
          %895 = vmatprep.mubr.bf16.mxu0 0
          %896 = vmatmul.mubr.bf16.gmra.mxu0 %v759
          %v897 = vpop.f32.mrf.mxu0
          %v898 = vadd.f32 %v816, %v897
          %v899 = vpop.f32.mrf.mxu0
          %v900 = vadd.f32 %v820, %v899
          %v901 = vpop.f32.mrf.mxu0
          %v902 = vadd.f32 %v816, %v901
          %v903 = vpop.f32.mrf.mxu0
          %v904 = vadd.f32 %v820, %v903
          %905 = vmatprep.mubr.bf16.mxu0 0
          %906 = vmatmul.mubr.bf16.gmra.mxu0 %v760
          %v907 = vpop.f32.mrf.mxu0
          %v908 = vadd.f32 %v816, %v907
          %v909 = vpop.f32.mrf.mxu0
          %v910 = vadd.f32 %v820, %v909
          %v911 = vpop.f32.mrf.mxu0
          %v912 = vadd.f32 %v816, %v911
          %v913 = vpop.f32.mrf.mxu0
          %v914 = vadd.f32 %v820, %v913
          %915 = vmatprep.mubr.bf16.mxu0 0
          %916 = vmatmul.mubr.bf16.gmra.mxu0 %v761
          %v917 = vpop.f32.mrf.mxu0
          %v918 = vadd.f32 %v816, %v917
          %v919 = vpop.f32.mrf.mxu0
          %v920 = vadd.f32 %v820, %v919
          %v921 = vpop.f32.mrf.mxu0
          %v922 = vadd.f32 %v816, %v921
          %v923 = vpop.f32.mrf.mxu0
          %v924 = vadd.f32 %v820, %v923
          %925 = vmatprep.mubr.bf16.mxu0 0
          %926 = vmatmul.mubr.bf16.gmra.mxu0 %v762
          %v927 = vpop.f32.mrf.mxu0
          %v928 = vadd.f32 %v816, %v927
          %v929 = vpop.f32.mrf.mxu0
          %v930 = vadd.f32 %v820, %v929
          %v931 = vpop.f32.mrf.mxu0
          %v932 = vadd.f32 %v816, %v931
          %v933 = vpop.f32.mrf.mxu0
          %v934 = vadd.f32 %v820, %v933
          %935 = vdwg.mxu0
          %v936 = vmax.f32 %v858, 0.0
          %v937 = vmax.f32 %v860, 0.0
          %v938 = vmax.f32 %v862, 0.0
          %v939 = vmax.f32 %v864, 0.0
          %v940 = vmax.f32 %v868, 0.0
          %v941 = vmax.f32 %v870, 0.0
          %v942 = vmax.f32 %v872, 0.0
          %v943 = vmax.f32 %v874, 0.0
          %v944 = vmax.f32 %v878, 0.0
          %v945 = vmax.f32 %v880, 0.0
          %v946 = vmax.f32 %v882, 0.0
          %v947 = vmax.f32 %v884, 0.0
          %v948 = vmax.f32 %v888, 0.0
          %v949 = vmax.f32 %v890, 0.0
          %v950 = vmax.f32 %v892, 0.0
          %v951 = vmax.f32 %v894, 0.0
          %v952 = vmax.f32 %v898, 0.0
          %v953 = vmax.f32 %v900, 0.0
          %v954 = vmax.f32 %v902, 0.0
          %v955 = vmax.f32 %v904, 0.0
          %v956 = vmax.f32 %v908, 0.0
          %v957 = vmax.f32 %v910, 0.0
          %v958 = vmax.f32 %v912, 0.0
          %v959 = vmax.f32 %v914, 0.0
          %v960 = vmax.f32 %v918, 0.0
          %v961 = vmax.f32 %v920, 0.0
          %v962 = vmax.f32 %v922, 0.0
          %v963 = vmax.f32 %v924, 0.0
          %v964 = vmax.f32 %v928, 0.0
          %v965 = vmax.f32 %v930, 0.0
          %v966 = vmax.f32 %v932, 0.0
          %v967 = vmax.f32 %v934, 0.0
          %v968 = vpack.c.bf16 %v938, %v936
          %v969 = vpack.c.bf16 %v939, %v937
          %v970 = vpack.c.bf16 %v942, %v940
          %v971 = vpack.c.bf16 %v943, %v941
          %v972 = vpack.c.bf16 %v946, %v944
          %v973 = vpack.c.bf16 %v947, %v945
          %v974 = vpack.c.bf16 %v950, %v948
          %v975 = vpack.c.bf16 %v951, %v949
          %v976 = vpack.c.bf16 %v954, %v952
          %v977 = vpack.c.bf16 %v955, %v953
          %v978 = vpack.c.bf16 %v958, %v956
          %v979 = vpack.c.bf16 %v959, %v957
          %v980 = vpack.c.bf16 %v962, %v960
          %v981 = vpack.c.bf16 %v963, %v961
          %v982 = vpack.c.bf16 %v966, %v964
          %v983 = vpack.c.bf16 %v967, %v965
          %v984 = vld [vmem:[%s5] sm:$0xff]
          %v985 = vld [vmem:[%s5 + $0x8] sm:$0xff]
          %v986 = vld [vmem:[%s5 + $0x10] sm:$0xff]
          %v987 = vld [vmem:[%s5 + $0x18] sm:$0xff]
          %v988 = vld [vmem:[%s5 + $0x20] sm:$0xff]
          %v989 = vld [vmem:[%s5 + $0x28] sm:$0xff]
          %v990 = vld [vmem:[%s5 + $0x30] sm:$0xff]
          %v991 = vld [vmem:[%s5 + $0x38] sm:$0xff]
          %v992 = vld [vmem:[%s5 + $0x40] sm:$0xff]
          %v993 = vld [vmem:[%s5 + $0x48] sm:$0xff]
          %v994 = vld [vmem:[%s5 + $0x50] sm:$0xff]
          %v995 = vld [vmem:[%s5 + $0x58] sm:$0xff]
          %v996 = vld [vmem:[%s5 + $0x60] sm:$0xff]
          %v997 = vld [vmem:[%s5 + $0x68] sm:$0xff]
          %v998 = vld [vmem:[%s5 + $0x70] sm:$0xff]
          %v999 = vld [vmem:[%s5 + $0x78] sm:$0xff]
          %v1000 = vld [vmem:[%s5 + $0x80] sm:$0xff]
          %v1001 = vld [vmem:[%s5 + $0x88] sm:$0xff]
          %v1002 = vld [vmem:[%s5 + $0x90] sm:$0xff]
          %v1003 = vld [vmem:[%s5 + $0x98] sm:$0xff]
          %v1004 = vld [vmem:[%s5 + $0xa0] sm:$0xff]
          %v1005 = vld [vmem:[%s5 + $0xa8] sm:$0xff]
          %v1006 = vld [vmem:[%s5 + $0xb0] sm:$0xff]
          %v1007 = vld [vmem:[%s5 + $0xb8] sm:$0xff]
          %v1008 = vld [vmem:[%s5 + $0xc0] sm:$0xff]
          %v1009 = vld [vmem:[%s5 + $0xc8] sm:$0xff]
          %v1010 = vld [vmem:[%s5 + $0xd0] sm:$0xff]
          %v1011 = vld [vmem:[%s5 + $0xd8] sm:$0xff]
          %v1012 = vld [vmem:[%s5 + $0xe0] sm:$0xff]
          %v1013 = vld [vmem:[%s5 + $0xe8] sm:$0xff]
          %v1014 = vld [vmem:[%s5 + $0xf0] sm:$0xff]
          %v1015 = vld [vmem:[%s5 + $0xf8] sm:$0xff]
          %v1016 = vpack.c.bf16 %v985, %v984
          %v1017 = vpack.c.bf16 %v987, %v986
          %v1018 = vpack.c.bf16 %v989, %v988
          %v1019 = vpack.c.bf16 %v991, %v990
          %v1020 = vpack.c.bf16 %v993, %v992
          %v1021 = vpack.c.bf16 %v995, %v994
          %v1022 = vpack.c.bf16 %v997, %v996
          %v1023 = vpack.c.bf16 %v999, %v998
          %v1024 = vpack.c.bf16 %v1001, %v1000
          %v1025 = vpack.c.bf16 %v1003, %v1002
          %v1026 = vpack.c.bf16 %v1005, %v1004
          %v1027 = vpack.c.bf16 %v1007, %v1006
          %v1028 = vpack.c.bf16 %v1009, %v1008
          %v1029 = vpack.c.bf16 %v1011, %v1010
          %v1030 = vpack.c.bf16 %v1013, %v1012
          %v1031 = vpack.c.bf16 %v1015, %v1014
          %v1032 = vld [vmem:[%s6] sm:$0x1]
          %v1034 = vlaneseq
          %v1035 = vshrl.u32 %v1034, 7
          %v1036 = vsub.s32 0, %v1035
          %v1037 = vrot.slane %v1032, %v1036
          %1039 = vmatprep.subr.bf16.mxu0 0
          %1040 = vmatpush1.bf16.msra.mxu0 %v1023
          %1041 = vmatprep.subr.bf16.mxu0 0
          %1042 = vmatpush1.bf16.msra.mxu0 %v1022
          %1043 = vmatprep.subr.bf16.mxu0 0
          %1044 = vmatpush1.bf16.msra.mxu0 %v1021
          %1045 = vmatprep.subr.bf16.mxu0 0
          %1046 = vmatpush1.bf16.msra.mxu0 %v1020
          %1047 = vmatprep.subr.bf16.mxu0 0
          %1048 = vmatpush1.bf16.msra.mxu0 %v1019
          %1049 = vmatprep.subr.bf16.mxu0 0
          %1050 = vmatpush1.bf16.msra.mxu0 %v1018
          %1051 = vmatprep.subr.bf16.mxu0 0
          %1052 = vmatpush1.bf16.msra.mxu0 %v1017
          %1053 = vmatprep.subr.bf16.mxu0 0
          %1054 = vmatpush1.bf16.msra.mxu0 %v1016
          %1055 = vmatprep.subr.bf16.mxu0 0
          %1056 = vmatpush2.bf16.msra.mxu0 %v1031
          %1057 = vmatprep.subr.bf16.mxu0 0
          %1058 = vmatpush2.bf16.msra.mxu0 %v1030
          %1059 = vmatprep.subr.bf16.mxu0 0
          %1060 = vmatpush2.bf16.msra.mxu0 %v1029
          %1061 = vmatprep.subr.bf16.mxu0 0
          %1062 = vmatpush2.bf16.msra.mxu0 %v1028
          %1063 = vmatprep.subr.bf16.mxu0 0
          %1064 = vmatpush2.bf16.msra.mxu0 %v1027
          %1065 = vmatprep.subr.bf16.mxu0 0
          %1066 = vmatpush2.bf16.msra.mxu0 %v1026
          %1067 = vmatprep.subr.bf16.mxu0 0
          %1068 = vmatpush2.bf16.msra.mxu0 %v1025
          %1069 = vmatprep.subr.bf16.mxu0 0
          %1070 = vmatpush2.bf16.msra.mxu0 %v1024
          %1071 = vmatprep.mubr.bf16.mxu0 %v969
          %1072 = vmatmul.mubr.bf16.gmra.mxu0 %v968
          %v1073 = vpop.f32.mrf.mxu0
          %v1074 = vadd.f32 %v1037, %v1073
          %v1075 = vpop.f32.mrf.mxu0
          %v1076 = vpop.f32.mrf.mxu0
          %v1077 = vadd.f32 %v1037, %v1076
          %v1078 = vpop.f32.mrf.mxu0
          %1079 = vmatprep.mubr.bf16.mxu0 %v971
          %1080 = vmatmul.mubr.bf16.gmra.mxu0 %v970
          %v1081 = vpop.f32.mrf.mxu0
          %v1082 = vadd.f32 %v1037, %v1081
          %v1083 = vpop.f32.mrf.mxu0
          %v1084 = vpop.f32.mrf.mxu0
          %v1085 = vadd.f32 %v1037, %v1084
          %v1086 = vpop.f32.mrf.mxu0
          %1087 = vmatprep.mubr.bf16.mxu0 %v973
          %1088 = vmatmul.mubr.bf16.gmra.mxu0 %v972
          %v1089 = vpop.f32.mrf.mxu0
          %v1090 = vadd.f32 %v1037, %v1089
          %v1091 = vpop.f32.mrf.mxu0
          %v1092 = vpop.f32.mrf.mxu0
          %v1093 = vadd.f32 %v1037, %v1092
          %v1094 = vpop.f32.mrf.mxu0
          %1095 = vmatprep.mubr.bf16.mxu0 %v975
          %1096 = vmatmul.mubr.bf16.gmra.mxu0 %v974
          %v1097 = vpop.f32.mrf.mxu0
          %v1098 = vadd.f32 %v1037, %v1097
          %v1099 = vpop.f32.mrf.mxu0
          %v1100 = vpop.f32.mrf.mxu0
          %v1101 = vadd.f32 %v1037, %v1100
          %v1102 = vpop.f32.mrf.mxu0
          %1103 = vmatprep.mubr.bf16.mxu0 %v977
          %1104 = vmatmul.mubr.bf16.gmra.mxu0 %v976
          %v1105 = vpop.f32.mrf.mxu0
          %v1106 = vadd.f32 %v1037, %v1105
          %v1107 = vpop.f32.mrf.mxu0
          %v1108 = vpop.f32.mrf.mxu0
          %v1109 = vadd.f32 %v1037, %v1108
          %v1110 = vpop.f32.mrf.mxu0
          %1111 = vmatprep.mubr.bf16.mxu0 %v979
          %1112 = vmatmul.mubr.bf16.gmra.mxu0 %v978
          %v1113 = vpop.f32.mrf.mxu0
          %v1114 = vadd.f32 %v1037, %v1113
          %v1115 = vpop.f32.mrf.mxu0
          %v1116 = vpop.f32.mrf.mxu0
          %v1117 = vadd.f32 %v1037, %v1116
          %v1118 = vpop.f32.mrf.mxu0
          %1119 = vmatprep.mubr.bf16.mxu0 %v981
          %1120 = vmatmul.mubr.bf16.gmra.mxu0 %v980
          %v1121 = vpop.f32.mrf.mxu0
          %v1122 = vadd.f32 %v1037, %v1121
          %v1123 = vpop.f32.mrf.mxu0
          %v1124 = vpop.f32.mrf.mxu0
          %v1125 = vadd.f32 %v1037, %v1124
          %v1126 = vpop.f32.mrf.mxu0
          %1127 = vmatprep.mubr.bf16.mxu0 %v983
          %1128 = vmatmul.mubr.bf16.gmra.mxu0 %v982
          %v1129 = vpop.f32.mrf.mxu0
          %v1130 = vadd.f32 %v1037, %v1129
          %v1131 = vpop.f32.mrf.mxu0
          %v1132 = vpop.f32.mrf.mxu0
          %v1133 = vadd.f32 %v1037, %v1132
          %v1134 = vpop.f32.mrf.mxu0
          %1135 = vdwg.mxu0
          %1136 = vst [vmem:[%s314] sm:$0xff] %v1074
          %1137 = vst [vmem:[%s314 + $0x8] sm:$0xff] %v1077
          %1138 = vst [vmem:[%s314 + $0x10] sm:$0xff] %v1082
          %1139 = vst [vmem:[%s314 + $0x18] sm:$0xff] %v1085
          %1140 = vst [vmem:[%s314 + $0x20] sm:$0xff] %v1090
          %1141 = vst [vmem:[%s314 + $0x28] sm:$0xff] %v1093
          %1142 = vst [vmem:[%s314 + $0x30] sm:$0xff] %v1098
          %1143 = vst [vmem:[%s314 + $0x38] sm:$0xff] %v1101
          %1144 = vst [vmem:[%s314 + $0x40] sm:$0xff] %v1106
          %1145 = vst [vmem:[%s314 + $0x48] sm:$0xff] %v1109
          %1146 = vst [vmem:[%s314 + $0x50] sm:$0xff] %v1114
          %1147 = vst [vmem:[%s314 + $0x58] sm:$0xff] %v1117
          %1148 = vst [vmem:[%s314 + $0x60] sm:$0xff] %v1122
          %1149 = vst [vmem:[%s314 + $0x68] sm:$0xff] %v1125
          %1150 = vst [vmem:[%s314 + $0x70] sm:$0xff] %v1130
          %1151 = vst [vmem:[%s314 + $0x78] sm:$0xff] %v1133
        $region56: #{gnn_forward.3} parent=47 // pred_fallthru
          _
        %s1152 = sand.u32 %s203, 1
        %s1153 = scalar_lea.sflag [#allocation4], %s1152
        %s1154 = sand.u32 %s203, 1
        %s1155 = smul.addr %s1154, 128
        %s1156 = scalar_lea.vmem [#allocation3], %s1155
        // Predicated region
        $region57: #{gnn_forward.3} parent=47 // pred_check
          %p1157 = pneg %p213
        $region58: #{gnn_forward.3} parent=47 // pred_check_branch
          %1159 = sbr.rel (%p1157) target = $region60
        $region59: #{gnn_forward.3} parent=47 // pred_region
          %s1160 = smul.u32 16, %s25
          %s1162 = ssub.s32 2048, 2048
          %1163 = vsyncadd %s1153, %s1162
          %s1164 = smul.addr %s1160, 128
          %s1165 = scalar_lea.hbm %s7, %s1164
          %s1166 = sshll.u32 %s1156, 4
          %s1167 = int_to_ptr.vmem [resolvable:$true] %s1166
          %1172 = dma.vmem_to_hbm [thread:$0]  %s1167, 2048, %s1165, %s1153, 128, 128, 8
        $region60: #{gnn_forward.3} parent=47 // pred_fallthru
          _
      $region48: #{gnn_forward.3} parent=5 // pred_fallthru
        _
      %p1173 = scmp.le.s32.totalorder 2, %s16
      // Predicated region
      $region61: #{gnn_forward.3} parent=5 // pred_check
        %p1174 = pneg %p1173
      $region62: #{gnn_forward.3} parent=5 // pred_check_branch
        %1176 = sbr.rel (%p1174) target = $region64
      $region63: #{gnn_forward.3} parent=5 // pred_region
        %s1177 = ssub.s32 %s16, 2
        // Predicated region
        $region65: #{gnn_forward.3} parent=63 // pred_check
          %p1178 = pneg %p219
        $region66: #{gnn_forward.3} parent=63 // pred_check_branch
          %1180 = sbr.rel (%p1178) target = $region68
        $region67: #{gnn_forward.3} parent=63 // pred_region
          %s1181 = sand.u32 %s204, 1
          %s1182 = scalar_lea.sflag [#allocation4], %s1181
          %s1183 = sand.u32 %s204, 1
          %s1184 = smul.addr %s1183, 128
          %s1185 = scalar_lea.vmem [#allocation3], %s1184
          %1186 = dma.done %s1182, 2048
        $region68: #{gnn_forward.3} parent=63 // pred_fallthru
          _
      $region64: #{gnn_forward.3} parent=5 // pred_fallthru
        _
    $region6: #{gnn_forward.3} parent=1 // loop_footer
      %s20 = sadd.s32 1, %s16
    $region7: #{gnn_forward.3} parent=1 // loop_footer_branch
      %15 = sbr.rel target = $region3
    $region8: #{gnn_forward.3} parent=1 // loop_exit
      _
    %1187 = vsyncpa [#allocation4], 1
    %s1188 = scalar_lea.sflag [#allocation4], 1
    %1189 = vsyncpa %s1188, 1

// kernel: gnn_forward.2
$region0: #{gnn_forward.2}
  #allocation0 [shape = 'u32[]', space=smem, size = 0x4, offset = 0x4, fixed_abs, tag = 'smem constant byte address 0x4 - core index']
  #allocation1 [shape = 'u32[144,128]{1,0:T(1,128)}', space=vmem, size = 0x12000, scoped, tag = 'internal scratch']
  #allocation2 [shape = 'f32[128,128]{1,0:T(8,128)}', space=vmem, size = 0x10000, scoped, tag = 'scratch operand']
  %s0 = inlined_call_operand.vmem [shape: s32[1,512], index: 0, kind: input, shape index: {}]
  %s1 = inlined_call_operand.vmem [shape: f32[512,128], index: 1, kind: input, shape index: {}]
  %s2 = inlined_call_operand.vmem [shape: f32[256,128], index: 2, kind: input, shape index: {}]
  %s3 = inlined_call_operand.vmem [shape: f32[128,256], index: 3, kind: input, shape index: {}]
  %s4 = inlined_call_operand.vmem [shape: f32[1,256], index: 4, kind: input, shape index: {}]
  %s5 = inlined_call_operand.vmem [shape: f32[256,128], index: 5, kind: input, shape index: {}]
  %s6 = inlined_call_operand.vmem [shape: f32[1,128], index: 6, kind: input, shape index: {}]
  %s7 = inlined_call_operand.vmem [shape: f32[256,128], index: 7, kind: output, shape index: {}]
  %s8 = sld [smem:[#allocation0]]
  $region69: #{gnn_forward.2} parent=0
    _
  %s10 = ssub.s32 1, %s8
  %s11 = scalar_select 0, %s10, %s8
  loop: start=0, step=1, limit=6
  $region2: #{gnn_forward.2} parent=0 // loop_pre_header
    _
  $region3: #{gnn_forward.2} parent=0 // loop_header
    %s13 = sphi 0, %s17
    %p14 = scmp.ge.s32.totalorder %s13, 6
    %s20 = sphi 0, %s32
    %s21 = sphi 0, %s28
    %s22 = sphi 0, %s20
    %s23 = sphi 0, %s21
    %s24 = sphi 0, %s22
    %s25 = sphi 0, %s23
    %s35 = sphi 0, %s37
    %s38 = sphi 0, %s35
    %s39 = sphi 0, %s38
    %s55 = sphi 0, %s39
    %s61 = sphi 0, %s63
    %s64 = sphi 0, %s61
    %s65 = sphi 0, %s64
    %s81 = sphi 0, %s65
    %s87 = sphi 0, %s89
    %s90 = sphi 0, %s87
    %s91 = sphi 0, %s90
    %s107 = sphi 0, %s91
    %s111 = sphi 0, %s111
    %s113 = sphi 0, %s111
    %s114 = sphi 0, %s113
    %s128 = sphi 0, %s114
    %s132 = sphi 0, %s132
    %s134 = sphi 0, %s132
    %s135 = sphi 0, %s134
    %s149 = sphi 0, %s135
    %s153 = sphi 0, %s153
    %s155 = sphi 0, %s153
    %s156 = sphi 0, %s155
    %s170 = sphi 0, %s156
    %s174 = sphi 0, %s174
    %s176 = sphi 0, %s174
    %s177 = sphi 0, %s176
    %s191 = sphi 0, %s177
    %s197 = sphi 0, %s199
    %s200 = sphi 0, %s197
    %s201 = sphi 0, %s200
    %s217 = sphi 0, %s201
  $region4: #{gnn_forward.2} parent=0 // loop_header_branch
    %16 = sbr.rel (%p14) target = $region8
  $region5: #{gnn_forward.2} parent=0 // loop_body
    %s18 = ssub.s32 %s13, 1
    %s19 = ssub.s32 %s13, 2
    %s26 = sadd.s32 1, %s21
    %p27 = scmp.ge.s32.totalorder %s26, 2
    %s28 = scalar_select %p27, 0, %s26
    %s29 = sadd.s32 1, %s20
    %s30 = scalar_select %p27, %s29, %s20
    %p31 = scmp.ge.s32.totalorder %s30, 2
    %s32 = scalar_select %p31, 0, %s30
    %s33 = ssub.s32 %s21, %s28
    %p34 = scmp.eq.s32.totalorder %s33, 0
    %s36 = sadd.s32 %s35, 1
    %s37 = scalar_select %p34, %s35, %s36
    %p40 = pneg %p34
    %p41 = scmp.eq.s32.totalorder %s13, 3
    %p42 = por %p40, %p41
    %p43 = scmp.ne.s32.totalorder %s35, %s38
    %p44 = scmp.eq.s32.totalorder %s13, 0
    %p45 = por %p43, %p44
    %p46 = scmp.ne.s32.totalorder %s35, %s38
    %p47 = scmp.eq.s32.totalorder %s18, 3
    %p48 = por %p46, %p47
    %p49 = scmp.ne.s32.totalorder %s38, %s39
    %p50 = scmp.eq.s32.totalorder %s18, 0
    %p51 = por %p49, %p50
    %p52 = scmp.ne.s32.totalorder %s38, %s39
    %p53 = scmp.eq.s32.totalorder %s19, 3
    %p54 = por %p52, %p53
    %p56 = scmp.ne.s32.totalorder %s39, %s55
    %p57 = scmp.eq.s32.totalorder %s19, 0
    %p58 = por %p56, %p57
    %s59 = ssub.s32 %s21, %s28
    %p60 = scmp.eq.s32.totalorder %s59, 0
    %s62 = sadd.s32 %s61, 1
    %s63 = scalar_select %p60, %s61, %s62
    %p66 = pneg %p60
    %p67 = scmp.eq.s32.totalorder %s13, 3
    %p68 = por %p66, %p67
    %p69 = scmp.ne.s32.totalorder %s61, %s64
    %p70 = scmp.eq.s32.totalorder %s13, 0
    %p71 = por %p69, %p70
    %p72 = scmp.ne.s32.totalorder %s61, %s64
    %p73 = scmp.eq.s32.totalorder %s18, 3
    %p74 = por %p72, %p73
    %p75 = scmp.ne.s32.totalorder %s64, %s65
    %p76 = scmp.eq.s32.totalorder %s18, 0
    %p77 = por %p75, %p76
    %p78 = scmp.ne.s32.totalorder %s64, %s65
    %p79 = scmp.eq.s32.totalorder %s19, 3
    %p80 = por %p78, %p79
    %p82 = scmp.ne.s32.totalorder %s65, %s81
    %p83 = scmp.eq.s32.totalorder %s19, 0
    %p84 = por %p82, %p83
    %s85 = ssub.s32 %s20, %s32
    %p86 = scmp.eq.s32.totalorder %s85, 0
    %s88 = sadd.s32 %s87, 1
    %s89 = scalar_select %p86, %s87, %s88
    %p92 = pneg %p86
    %p93 = scmp.eq.s32.totalorder %s13, 3
    %p94 = por %p92, %p93
    %p95 = scmp.ne.s32.totalorder %s87, %s90
    %p96 = scmp.eq.s32.totalorder %s13, 0
    %p97 = por %p95, %p96
    %p98 = scmp.ne.s32.totalorder %s87, %s90
    %p99 = scmp.eq.s32.totalorder %s18, 3
    %p100 = por %p98, %p99
    %p101 = scmp.ne.s32.totalorder %s90, %s91
    %p102 = scmp.eq.s32.totalorder %s18, 0
    %p103 = por %p101, %p102
    %p104 = scmp.ne.s32.totalorder %s90, %s91
    %p105 = scmp.eq.s32.totalorder %s19, 3
    %p106 = por %p104, %p105
    %p108 = scmp.ne.s32.totalorder %s91, %s107
    %p109 = scmp.eq.s32.totalorder %s19, 0
    %p110 = por %p108, %p109
    %s112 = sadd.s32 %s111, 1
    %p115 = scmp.eq.s32.totalorder %s13, 3
    %p116 = scmp.ne.s32.totalorder %s111, %s113
    %p117 = scmp.eq.s32.totalorder %s13, 0
    %p118 = por %p116, %p117
    %p119 = scmp.ne.s32.totalorder %s111, %s113
    %p120 = scmp.eq.s32.totalorder %s18, 3
    %p121 = por %p119, %p120
    %p122 = scmp.ne.s32.totalorder %s113, %s114
    %p123 = scmp.eq.s32.totalorder %s18, 0
    %p124 = por %p122, %p123
    %p125 = scmp.ne.s32.totalorder %s113, %s114
    %p126 = scmp.eq.s32.totalorder %s19, 3
    %p127 = por %p125, %p126
    %p129 = scmp.ne.s32.totalorder %s114, %s128
    %p130 = scmp.eq.s32.totalorder %s19, 0
    %p131 = por %p129, %p130
    %s133 = sadd.s32 %s132, 1
    %p136 = scmp.eq.s32.totalorder %s13, 3
    %p137 = scmp.ne.s32.totalorder %s132, %s134
    %p138 = scmp.eq.s32.totalorder %s13, 0
    %p139 = por %p137, %p138
    %p140 = scmp.ne.s32.totalorder %s132, %s134
    %p141 = scmp.eq.s32.totalorder %s18, 3
    %p142 = por %p140, %p141
    %p143 = scmp.ne.s32.totalorder %s134, %s135
    %p144 = scmp.eq.s32.totalorder %s18, 0
    %p145 = por %p143, %p144
    %p146 = scmp.ne.s32.totalorder %s134, %s135
    %p147 = scmp.eq.s32.totalorder %s19, 3
    %p148 = por %p146, %p147
    %p150 = scmp.ne.s32.totalorder %s135, %s149
    %p151 = scmp.eq.s32.totalorder %s19, 0
    %p152 = por %p150, %p151
    %s154 = sadd.s32 %s153, 1
    %p157 = scmp.eq.s32.totalorder %s13, 3
    %p158 = scmp.ne.s32.totalorder %s153, %s155
    %p159 = scmp.eq.s32.totalorder %s13, 0
    %p160 = por %p158, %p159
    %p161 = scmp.ne.s32.totalorder %s153, %s155
    %p162 = scmp.eq.s32.totalorder %s18, 3
    %p163 = por %p161, %p162
    %p164 = scmp.ne.s32.totalorder %s155, %s156
    %p165 = scmp.eq.s32.totalorder %s18, 0
    %p166 = por %p164, %p165
    %p167 = scmp.ne.s32.totalorder %s155, %s156
    %p168 = scmp.eq.s32.totalorder %s19, 3
    %p169 = por %p167, %p168
    %p171 = scmp.ne.s32.totalorder %s156, %s170
    %p172 = scmp.eq.s32.totalorder %s19, 0
    %p173 = por %p171, %p172
    %s175 = sadd.s32 %s174, 1
    %p178 = scmp.eq.s32.totalorder %s13, 3
    %p179 = scmp.ne.s32.totalorder %s174, %s176
    %p180 = scmp.eq.s32.totalorder %s13, 0
    %p181 = por %p179, %p180
    %p182 = scmp.ne.s32.totalorder %s174, %s176
    %p183 = scmp.eq.s32.totalorder %s18, 3
    %p184 = por %p182, %p183
    %p185 = scmp.ne.s32.totalorder %s176, %s177
    %p186 = scmp.eq.s32.totalorder %s18, 0
    %p187 = por %p185, %p186
    %p188 = scmp.ne.s32.totalorder %s176, %s177
    %p189 = scmp.eq.s32.totalorder %s19, 3
    %p190 = por %p188, %p189
    %p192 = scmp.ne.s32.totalorder %s177, %s191
    %p193 = scmp.eq.s32.totalorder %s19, 0
    %p194 = por %p192, %p193
    %s195 = ssub.s32 %s20, %s32
    %p196 = scmp.eq.s32.totalorder %s195, 0
    %s198 = sadd.s32 %s197, 1
    %s199 = scalar_select %p196, %s197, %s198
    %p202 = pneg %p196
    %p203 = scmp.eq.s32.totalorder %s13, 3
    %p204 = por %p202, %p203
    %p205 = scmp.ne.s32.totalorder %s197, %s200
    %p206 = scmp.eq.s32.totalorder %s13, 0
    %p207 = por %p205, %p206
    %p208 = scmp.ne.s32.totalorder %s197, %s200
    %p209 = scmp.eq.s32.totalorder %s18, 3
    %p210 = por %p208, %p209
    %p211 = scmp.ne.s32.totalorder %s200, %s201
    %p212 = scmp.eq.s32.totalorder %s18, 0
    %p213 = por %p211, %p212
    %p214 = scmp.ne.s32.totalorder %s200, %s201
    %p215 = scmp.eq.s32.totalorder %s19, 3
    %p216 = por %p214, %p215
    %p218 = scmp.ne.s32.totalorder %s201, %s217
    %p219 = scmp.eq.s32.totalorder %s19, 0
    %p220 = por %p218, %p219
    %p221 = scmp.le.s32.totalorder 1, %s13
    %p222 = scmp.lt.s32.totalorder %s13, 5
    %p223 = pnand %p221, %p222
    %p224 = pneg %p223
    // Predicated region
    $region9: #{gnn_forward.2} parent=5 // pred_check
      _
    $region10: #{gnn_forward.2} parent=5 // pred_check_branch
      %226 = sbr.rel (%p223) target = $region12
    $region11: #{gnn_forward.2} parent=5 // pred_region
      %s227 = ssub.s32 %s13, 1
      // Predicated region
      $region13: #{gnn_forward.2} parent=11 // pred_check
        %p228 = pneg %p124
      $region14: #{gnn_forward.2} parent=11 // pred_check_branch
        %230 = sbr.rel (%p228) target = $region16
      $region15: #{gnn_forward.2} parent=11 // pred_region
        _
      $region16: #{gnn_forward.2} parent=11 // pred_fallthru
        _
      // Predicated region
      $region17: #{gnn_forward.2} parent=11 // pred_check
        %p231 = pneg %p145
      $region18: #{gnn_forward.2} parent=11 // pred_check_branch
        %233 = sbr.rel (%p231) target = $region20
      $region19: #{gnn_forward.2} parent=11 // pred_region
        _
      $region20: #{gnn_forward.2} parent=11 // pred_fallthru
        _
      // Predicated region
      $region21: #{gnn_forward.2} parent=11 // pred_check
        %p234 = pneg %p166
      $region22: #{gnn_forward.2} parent=11 // pred_check_branch
        %236 = sbr.rel (%p234) target = $region24
      $region23: #{gnn_forward.2} parent=11 // pred_region
        _
      $region24: #{gnn_forward.2} parent=11 // pred_fallthru
        _
      // Predicated region
      $region25: #{gnn_forward.2} parent=11 // pred_check
        %p237 = pneg %p187
      $region26: #{gnn_forward.2} parent=11 // pred_check_branch
        %239 = sbr.rel (%p237) target = $region28
      $region27: #{gnn_forward.2} parent=11 // pred_region
        _
      $region28: #{gnn_forward.2} parent=11 // pred_fallthru
        _
    $region12: #{gnn_forward.2} parent=5 // pred_fallthru
      _
    %p240 = scmp.lt.s32.totalorder %s13, 4
    // Predicated region
    $region29: #{gnn_forward.2} parent=5 // pred_check
      %p241 = pneg %p240
    $region30: #{gnn_forward.2} parent=5 // pred_check_branch
      %243 = sbr.rel (%p241) target = $region32
    $region31: #{gnn_forward.2} parent=5 // pred_region
      // Predicated region
      $region33: #{gnn_forward.2} parent=31 // pred_check
        %p244 = pneg %p45
      $region34: #{gnn_forward.2} parent=31 // pred_check_branch
        %246 = sbr.rel (%p244) target = $region36
      $region35: #{gnn_forward.2} parent=31 // pred_region
        %s247 = smul.u32 2, %s21
        %p248 = scmp.lt.s32.totalorder %s247, 3
        %s249 = scalar_select %p248, %s247, 3
        %s250 = scalar_lea.vmem %s0, %s249
        %s251 = smul.u32 2, %s21
      $region36: #{gnn_forward.2} parent=31 // pred_fallthru
        _
      // Predicated region
      $region37: #{gnn_forward.2} parent=31 // pred_check
        %p252 = pneg %p71
      $region38: #{gnn_forward.2} parent=31 // pred_check_branch
        %254 = sbr.rel (%p252) target = $region40
      $region39: #{gnn_forward.2} parent=31 // pred_region
        %s255 = smul.u32 32, %s21
        %p256 = scmp.lt.s32.totalorder %s255, 63
        %s257 = scalar_select %p256, %s255, 63
        %s258 = smul.addr %s257, 8
        %s259 = scalar_lea.vmem %s1, %s258
        %s260 = smul.u32 32, %s21
      $region40: #{gnn_forward.2} parent=31 // pred_fallthru
        _
      // Predicated region
      $region41: #{gnn_forward.2} parent=31 // pred_check
        %p261 = pneg %p97
      $region42: #{gnn_forward.2} parent=31 // pred_check_branch
        %263 = sbr.rel (%p261) target = $region44
      $region43: #{gnn_forward.2} parent=31 // pred_region
        %s264 = smul.u32 16, %s20
        %p265 = scmp.lt.s32.totalorder %s264, 31
        %s266 = scalar_select %p265, %s264, 31
        %s267 = smul.addr %s266, 8
        %s268 = scalar_lea.vmem %s2, %s267
        %s269 = smul.u32 16, %s20
      $region44: #{gnn_forward.2} parent=31 // pred_fallthru
        _
    $region32: #{gnn_forward.2} parent=5 // pred_fallthru
      _
    %p270 = scmp.le.s32.totalorder 1, %s13
    %p271 = scmp.lt.s32.totalorder %s13, 5
    %p272 = pnand %p270, %p271
    %p273 = pneg %p272
    // Predicated region
    $region45: #{gnn_forward.2} parent=5 // pred_check
      _
    $region46: #{gnn_forward.2} parent=5 // pred_check_branch
      %275 = sbr.rel (%p272) target = $region48
    $region47: #{gnn_forward.2} parent=5 // pred_region
      %s276 = ssub.s32 %s13, 1
      %s277 = smul.u32 2, %s23
      %p278 = scmp.lt.s32.totalorder %s277, 3
      %s279 = scalar_select %p278, %s277, 3
      %s280 = scalar_lea.vmem %s0, %s279
      %p281 = pneg %p51
      %p282 = pneg %p48
      %s283 = smul.u32 32, %s23
      %p284 = scmp.lt.s32.totalorder %s283, 63
      %s285 = scalar_select %p284, %s283, 63
      %s286 = smul.addr %s285, 8
      %s287 = scalar_lea.vmem %s1, %s286
      %p288 = pneg %p77
      %p289 = pneg %p74
      %s290 = smul.u32 16, %s22
      %p291 = scmp.lt.s32.totalorder %s290, 31
      %s292 = scalar_select %p291, %s290, 31
      %s293 = smul.addr %s292, 8
      %s294 = scalar_lea.vmem %s2, %s293
      %p295 = pneg %p103
      %p296 = pneg %p100
      %p297 = pneg %p124
      %p298 = pneg %p121
      %p299 = pneg %p145
      %p300 = pneg %p142
      %p301 = pneg %p166
      %p302 = pneg %p163
      %p303 = pneg %p187
      %p304 = pneg %p184
      %p305 = pneg %p213
      %p306 = pneg %p210
      %s307 = smul.u32 16, %s22
      %p308 = scmp.lt.s32.totalorder %s307, 31
      %s309 = scalar_select %p308, %s307, 31
      %s310 = smul.addr %s309, 8
      %s311 = scalar_lea.vmem %s7, %s310
      %s312 = smul.u32 2, %s23
      %p313 = scmp.lt.s32.totalorder %s312, 3
      %s314 = scalar_select %p313, %s312, 3
      %s315 = scalar_lea.vmem %s0, %s314
      %s316 = smul.u32 2, %s23
      %s317 = smul.u32 32, %s23
      %p318 = scmp.lt.s32.totalorder %s317, 63
      %s319 = scalar_select %p318, %s317, 63
      %s320 = smul.addr %s319, 8
      %s321 = scalar_lea.vmem %s1, %s320
      %s322 = smul.u32 32, %s23
      %s323 = smul.u32 16, %s22
      %p324 = scmp.lt.s32.totalorder %s323, 31
      %s325 = scalar_select %p324, %s323, 31
      %s326 = smul.addr %s325, 8
      %s327 = scalar_lea.vmem %s2, %s326
      %s328 = smul.u32 16, %s22
      %s329 = smul.u32 16, %s22
      %p330 = scmp.lt.s32.totalorder %s329, 31
      %s331 = scalar_select %p330, %s329, 31
      %s332 = smul.addr %s331, 8
      %s333 = scalar_lea.vmem %s7, %s332
      %s334 = smul.u32 16, %s22
      %p336 = scmp.eq.s32.totalorder %s23, 0
      // Predicated region
      $region49: #{gnn_forward.2} parent=47 // pred_check
        %p337 = pneg %p336
      $region50: #{gnn_forward.2} parent=47 // pred_check_branch
        %339 = sbr.rel (%p337) target = $region52
      $region51: #{gnn_forward.2} parent=47 // pred_region
        %340 = vst [vmem:[#allocation2] sm:$0xff] 0.0
        %341 = vst [vmem:[#allocation2 + $0x8] sm:$0xff] 0.0
        %342 = vst [vmem:[#allocation2 + $0x10] sm:$0xff] 0.0
        %343 = vst [vmem:[#allocation2 + $0x18] sm:$0xff] 0.0
        %344 = vst [vmem:[#allocation2 + $0x20] sm:$0xff] 0.0
        %345 = vst [vmem:[#allocation2 + $0x28] sm:$0xff] 0.0
        %346 = vst [vmem:[#allocation2 + $0x30] sm:$0xff] 0.0
        %347 = vst [vmem:[#allocation2 + $0x38] sm:$0xff] 0.0
        %348 = vst [vmem:[#allocation2 + $0x40] sm:$0xff] 0.0
        %349 = vst [vmem:[#allocation2 + $0x48] sm:$0xff] 0.0
        %350 = vst [vmem:[#allocation2 + $0x50] sm:$0xff] 0.0
        %351 = vst [vmem:[#allocation2 + $0x58] sm:$0xff] 0.0
        %352 = vst [vmem:[#allocation2 + $0x60] sm:$0xff] 0.0
        %353 = vst [vmem:[#allocation2 + $0x68] sm:$0xff] 0.0
        %354 = vst [vmem:[#allocation2 + $0x70] sm:$0xff] 0.0
        %355 = vst [vmem:[#allocation2 + $0x78] sm:$0xff] 0.0
      $region52: #{gnn_forward.2} parent=47 // pred_fallthru
        _
      %s356 = smul.u32 %s22, 128
      %v357 = vlaneseq
      %v358 = vshrl.u32 %v357, 7
      %v359 = vadd.s32 %v358, 8
      %v360 = vadd.s32 %v358, 16
      %v361 = vadd.s32 %v358, 24
      %v362 = vadd.s32 %v358, 32
      %v363 = vadd.s32 %v358, 40
      %v364 = vadd.s32 %v358, 48
      %v365 = vadd.s32 %v358, 56
      %v366 = vadd.s32 %v358, 64
      %v367 = vadd.s32 %v358, 72
      %v368 = vadd.s32 %v358, 80
      %v369 = vadd.s32 %v358, 88
      %v370 = vadd.s32 %v358, 96
      %v371 = vadd.s32 %v358, 104
      %v372 = vadd.s32 %v358, 112
      %v373 = vadd.s32 %v358, 120
      %v374 = vstv %s356
      %v375 = vadd.s32 %v374, %v358
      %v376 = vadd.s32 %v374, %v359
      %v377 = vadd.s32 %v374, %v360
      %v378 = vadd.s32 %v374, %v361
      %v379 = vadd.s32 %v374, %v362
      %v380 = vadd.s32 %v374, %v363
      %v381 = vadd.s32 %v374, %v364
      %v382 = vadd.s32 %v374, %v365
      %v383 = vadd.s32 %v374, %v366
      %v384 = vadd.s32 %v374, %v367
      %v385 = vadd.s32 %v374, %v368
      %v386 = vadd.s32 %v374, %v369
      %v387 = vadd.s32 %v374, %v370
      %v388 = vadd.s32 %v374, %v371
      %v389 = vadd.s32 %v374, %v372
      %v390 = vadd.s32 %v374, %v373
      %v391 = vld [vmem:[%s315] sm:$0x3]
      %v392 = vlaneseq
      %v393 = vshrl.u32 %v392, 7
      %v394 = vsub.s32 0, %v393
      %v395 = vrot.slane %v391, %v394
      %v396 = vlaneseq
      %v397 = vshrl.u32 %v396, 7
      %v398 = vsub.s32 1, %v397
      %v399 = vrot.slane %v391, %v398
      %vm400 = vcmp.eq.s32.totalorder %v375, %v395
      %vm401 = vcmp.eq.s32.totalorder %v375, %v399
      %vm402 = vcmp.eq.s32.totalorder %v376, %v395
      %vm403 = vcmp.eq.s32.totalorder %v376, %v399
      %vm404 = vcmp.eq.s32.totalorder %v377, %v395
      %vm405 = vcmp.eq.s32.totalorder %v377, %v399
      %vm406 = vcmp.eq.s32.totalorder %v378, %v395
      %vm407 = vcmp.eq.s32.totalorder %v378, %v399
      %vm408 = vcmp.eq.s32.totalorder %v379, %v395
      %vm409 = vcmp.eq.s32.totalorder %v379, %v399
      %vm410 = vcmp.eq.s32.totalorder %v380, %v395
      %vm411 = vcmp.eq.s32.totalorder %v380, %v399
      %vm412 = vcmp.eq.s32.totalorder %v381, %v395
      %vm413 = vcmp.eq.s32.totalorder %v381, %v399
      %vm414 = vcmp.eq.s32.totalorder %v382, %v395
      %vm415 = vcmp.eq.s32.totalorder %v382, %v399
      %vm416 = vcmp.eq.s32.totalorder %v383, %v395
      %vm417 = vcmp.eq.s32.totalorder %v383, %v399
      %vm418 = vcmp.eq.s32.totalorder %v384, %v395
      %vm419 = vcmp.eq.s32.totalorder %v384, %v399
      %vm420 = vcmp.eq.s32.totalorder %v385, %v395
      %vm421 = vcmp.eq.s32.totalorder %v385, %v399
      %vm422 = vcmp.eq.s32.totalorder %v386, %v395
      %vm423 = vcmp.eq.s32.totalorder %v386, %v399
      %vm424 = vcmp.eq.s32.totalorder %v387, %v395
      %vm425 = vcmp.eq.s32.totalorder %v387, %v399
      %vm426 = vcmp.eq.s32.totalorder %v388, %v395
      %vm427 = vcmp.eq.s32.totalorder %v388, %v399
      %vm428 = vcmp.eq.s32.totalorder %v389, %v395
      %vm429 = vcmp.eq.s32.totalorder %v389, %v399
      %vm430 = vcmp.eq.s32.totalorder %v390, %v395
      %vm431 = vcmp.eq.s32.totalorder %v390, %v399
      %v432 = vsel %vm400, 1, 0
      %v433 = vsel %vm401, 1, 0
      %v434 = vsel %vm402, 1, 0
      %v435 = vsel %vm403, 1, 0
      %v436 = vsel %vm404, 1, 0
      %v437 = vsel %vm405, 1, 0
      %v438 = vsel %vm406, 1, 0
      %v439 = vsel %vm407, 1, 0
      %v440 = vsel %vm408, 1, 0
      %v441 = vsel %vm409, 1, 0
      %v442 = vsel %vm410, 1, 0
      %v443 = vsel %vm411, 1, 0
      %v444 = vsel %vm412, 1, 0
      %v445 = vsel %vm413, 1, 0
      %v446 = vsel %vm414, 1, 0
      %v447 = vsel %vm415, 1, 0
      %v448 = vsel %vm416, 1, 0
      %v449 = vsel %vm417, 1, 0
      %v450 = vsel %vm418, 1, 0
      %v451 = vsel %vm419, 1, 0
      %v452 = vsel %vm420, 1, 0
      %v453 = vsel %vm421, 1, 0
      %v454 = vsel %vm422, 1, 0
      %v455 = vsel %vm423, 1, 0
      %v456 = vsel %vm424, 1, 0
      %v457 = vsel %vm425, 1, 0
      %v458 = vsel %vm426, 1, 0
      %v459 = vsel %vm427, 1, 0
      %v460 = vsel %vm428, 1, 0
      %v461 = vsel %vm429, 1, 0
      %v462 = vsel %vm430, 1, 0
      %v463 = vsel %vm431, 1, 0
      %v464 = vcvt.s32.f32 %v432
      %v465 = vcvt.s32.f32 %v433
      %v466 = vcvt.s32.f32 %v434
      %v467 = vcvt.s32.f32 %v435
      %v468 = vcvt.s32.f32 %v436
      %v469 = vcvt.s32.f32 %v437
      %v470 = vcvt.s32.f32 %v438
      %v471 = vcvt.s32.f32 %v439
      %v472 = vcvt.s32.f32 %v440
      %v473 = vcvt.s32.f32 %v441
      %v474 = vcvt.s32.f32 %v442
      %v475 = vcvt.s32.f32 %v443
      %v476 = vcvt.s32.f32 %v444
      %v477 = vcvt.s32.f32 %v445
      %v478 = vcvt.s32.f32 %v446
      %v479 = vcvt.s32.f32 %v447
      %v480 = vcvt.s32.f32 %v448
      %v481 = vcvt.s32.f32 %v449
      %v482 = vcvt.s32.f32 %v450
      %v483 = vcvt.s32.f32 %v451
      %v484 = vcvt.s32.f32 %v452
      %v485 = vcvt.s32.f32 %v453
      %v486 = vcvt.s32.f32 %v454
      %v487 = vcvt.s32.f32 %v455
      %v488 = vcvt.s32.f32 %v456
      %v489 = vcvt.s32.f32 %v457
      %v490 = vcvt.s32.f32 %v458
      %v491 = vcvt.s32.f32 %v459
      %v492 = vcvt.s32.f32 %v460
      %v493 = vcvt.s32.f32 %v461
      %v494 = vcvt.s32.f32 %v462
      %v495 = vcvt.s32.f32 %v463
      %v496 = vpack.c.bf16 %v466, %v464
      %v497 = vpack.c.bf16 %v467, %v465
      %v498 = vpack.c.bf16 %v470, %v468
      %v499 = vpack.c.bf16 %v471, %v469
      %v500 = vpack.c.bf16 %v474, %v472
      %v501 = vpack.c.bf16 %v475, %v473
      %v502 = vpack.c.bf16 %v478, %v476
      %v503 = vpack.c.bf16 %v479, %v477
      %v504 = vpack.c.bf16 %v482, %v480
      %v505 = vpack.c.bf16 %v483, %v481
      %v506 = vpack.c.bf16 %v486, %v484
      %v507 = vpack.c.bf16 %v487, %v485
      %v508 = vpack.c.bf16 %v490, %v488
      %v509 = vpack.c.bf16 %v491, %v489
      %v510 = vpack.c.bf16 %v494, %v492
      %v511 = vpack.c.bf16 %v495, %v493
      %v512 = vld [vmem:[%s321] sm:$0xff]
      %v513 = vld [vmem:[%s321 + $0x8] sm:$0xff]
      %v514 = vld [vmem:[%s321 + $0x10] sm:$0xff]
      %v515 = vld [vmem:[%s321 + $0x18] sm:$0xff]
      %v516 = vld [vmem:[%s321 + $0x20] sm:$0xff]
      %v517 = vld [vmem:[%s321 + $0x28] sm:$0xff]
      %v518 = vld [vmem:[%s321 + $0x30] sm:$0xff]
      %v519 = vld [vmem:[%s321 + $0x38] sm:$0xff]
      %v520 = vld [vmem:[%s321 + $0x40] sm:$0xff]
      %v521 = vld [vmem:[%s321 + $0x48] sm:$0xff]
      %v522 = vld [vmem:[%s321 + $0x50] sm:$0xff]
      %v523 = vld [vmem:[%s321 + $0x58] sm:$0xff]
      %v524 = vld [vmem:[%s321 + $0x60] sm:$0xff]
      %v525 = vld [vmem:[%s321 + $0x68] sm:$0xff]
      %v526 = vld [vmem:[%s321 + $0x70] sm:$0xff]
      %v527 = vld [vmem:[%s321 + $0x78] sm:$0xff]
      %v528 = vld [vmem:[%s321 + $0x80] sm:$0xff]
      %v529 = vld [vmem:[%s321 + $0x88] sm:$0xff]
      %v530 = vld [vmem:[%s321 + $0x90] sm:$0xff]
      %v531 = vld [vmem:[%s321 + $0x98] sm:$0xff]
      %v532 = vld [vmem:[%s321 + $0xa0] sm:$0xff]
      %v533 = vld [vmem:[%s321 + $0xa8] sm:$0xff]
      %v534 = vld [vmem:[%s321 + $0xb0] sm:$0xff]
      %v535 = vld [vmem:[%s321 + $0xb8] sm:$0xff]
      %v536 = vld [vmem:[%s321 + $0xc0] sm:$0xff]
      %v537 = vld [vmem:[%s321 + $0xc8] sm:$0xff]
      %v538 = vld [vmem:[%s321 + $0xd0] sm:$0xff]
      %v539 = vld [vmem:[%s321 + $0xd8] sm:$0xff]
      %v540 = vld [vmem:[%s321 + $0xe0] sm:$0xff]
      %v541 = vld [vmem:[%s321 + $0xe8] sm:$0xff]
      %v542 = vld [vmem:[%s321 + $0xf0] sm:$0xff]
      %v543 = vld [vmem:[%s321 + $0xf8] sm:$0xff]
      %v544 = vpack.c.bf16 %v513, %v512
      %v545 = vpack.c.bf16 %v515, %v514
      %v546 = vpack.c.bf16 %v517, %v516
      %v547 = vpack.c.bf16 %v519, %v518
      %v548 = vpack.c.bf16 %v521, %v520
      %v549 = vpack.c.bf16 %v523, %v522
      %v550 = vpack.c.bf16 %v525, %v524
      %v551 = vpack.c.bf16 %v527, %v526
      %v552 = vpack.c.bf16 %v529, %v528
      %v553 = vpack.c.bf16 %v531, %v530
      %v554 = vpack.c.bf16 %v533, %v532
      %v555 = vpack.c.bf16 %v535, %v534
      %v556 = vpack.c.bf16 %v537, %v536
      %v557 = vpack.c.bf16 %v539, %v538
      %v558 = vpack.c.bf16 %v541, %v540
      %v559 = vpack.c.bf16 %v543, %v542
      %v560 = vld [vmem:[#allocation2] sm:$0xff]
      %v561 = vld [vmem:[#allocation2 + $0x8] sm:$0xff]
      %v562 = vld [vmem:[#allocation2 + $0x10] sm:$0xff]
      %v563 = vld [vmem:[#allocation2 + $0x18] sm:$0xff]
      %v564 = vld [vmem:[#allocation2 + $0x20] sm:$0xff]
      %v565 = vld [vmem:[#allocation2 + $0x28] sm:$0xff]
      %v566 = vld [vmem:[#allocation2 + $0x30] sm:$0xff]
      %v567 = vld [vmem:[#allocation2 + $0x38] sm:$0xff]
      %v568 = vld [vmem:[#allocation2 + $0x40] sm:$0xff]
      %v569 = vld [vmem:[#allocation2 + $0x48] sm:$0xff]
      %v570 = vld [vmem:[#allocation2 + $0x50] sm:$0xff]
      %v571 = vld [vmem:[#allocation2 + $0x58] sm:$0xff]
      %v572 = vld [vmem:[#allocation2 + $0x60] sm:$0xff]
      %v573 = vld [vmem:[#allocation2 + $0x68] sm:$0xff]
      %v574 = vld [vmem:[#allocation2 + $0x70] sm:$0xff]
      %v575 = vld [vmem:[#allocation2 + $0x78] sm:$0xff]
      %576 = vmatprep.subr.bf16.mxu0 0
      %577 = vmatpush1.bf16.msra.mxu0 %v551
      %578 = vmatprep.subr.bf16.mxu0 0
      %579 = vmatpush1.bf16.msra.mxu0 %v550
      %580 = vmatprep.subr.bf16.mxu0 0
      %581 = vmatpush1.bf16.msra.mxu0 %v549
      %582 = vmatprep.subr.bf16.mxu0 0
      %583 = vmatpush1.bf16.msra.mxu0 %v548
      %584 = vmatprep.subr.bf16.mxu0 0
      %585 = vmatpush1.bf16.msra.mxu0 %v547
      %586 = vmatprep.subr.bf16.mxu0 0
      %587 = vmatpush1.bf16.msra.mxu0 %v546
      %588 = vmatprep.subr.bf16.mxu0 0
      %589 = vmatpush1.bf16.msra.mxu0 %v545
      %590 = vmatprep.subr.bf16.mxu0 0
      %591 = vmatpush1.bf16.msra.mxu0 %v544
      %592 = vmatprep.subr.bf16.mxu0 0
      %593 = vmatpush2.bf16.msra.mxu0 %v559
      %594 = vmatprep.subr.bf16.mxu0 0
      %595 = vmatpush2.bf16.msra.mxu0 %v558
      %596 = vmatprep.subr.bf16.mxu0 0
      %597 = vmatpush2.bf16.msra.mxu0 %v557
      %598 = vmatprep.subr.bf16.mxu0 0
      %599 = vmatpush2.bf16.msra.mxu0 %v556
      %600 = vmatprep.subr.bf16.mxu0 0
      %601 = vmatpush2.bf16.msra.mxu0 %v555
      %602 = vmatprep.subr.bf16.mxu0 0
      %603 = vmatpush2.bf16.msra.mxu0 %v554
      %604 = vmatprep.subr.bf16.mxu0 0
      %605 = vmatpush2.bf16.msra.mxu0 %v553
      %606 = vmatprep.subr.bf16.mxu0 0
      %607 = vmatpush2.bf16.msra.mxu0 %v552
      %608 = vmatprep.mubr.bf16.mxu0 %v497
      %609 = vmatmul.mubr.bf16.gmra.mxu0 %v496
      %v610 = vpop.f32.mrf.mxu0
      %v611 = vadd.f32 0.0, %v610
      %v612 = vpop.f32.mrf.mxu0
      %v613 = vpop.f32.mrf.mxu0
      %v614 = vadd.f32 0.0, %v613
      %v615 = vpop.f32.mrf.mxu0
      %616 = vmatprep.mubr.bf16.mxu0 %v499
      %617 = vmatmul.mubr.bf16.gmra.mxu0 %v498
      %v618 = vpop.f32.mrf.mxu0
      %v619 = vadd.f32 0.0, %v618
      %v620 = vpop.f32.mrf.mxu0
      %v621 = vpop.f32.mrf.mxu0
      %v622 = vadd.f32 0.0, %v621
      %v623 = vpop.f32.mrf.mxu0
      %624 = vmatprep.mubr.bf16.mxu0 %v501
      %625 = vmatmul.mubr.bf16.gmra.mxu0 %v500
      %v626 = vpop.f32.mrf.mxu0
      %v627 = vadd.f32 0.0, %v626
      %v628 = vpop.f32.mrf.mxu0
      %v629 = vpop.f32.mrf.mxu0
      %v630 = vadd.f32 0.0, %v629
      %v631 = vpop.f32.mrf.mxu0
      %632 = vmatprep.mubr.bf16.mxu0 %v503
      %633 = vmatmul.mubr.bf16.gmra.mxu0 %v502
      %v634 = vpop.f32.mrf.mxu0
      %v635 = vadd.f32 0.0, %v634
      %v636 = vpop.f32.mrf.mxu0
      %v637 = vpop.f32.mrf.mxu0
      %v638 = vadd.f32 0.0, %v637
      %v639 = vpop.f32.mrf.mxu0
      %640 = vmatprep.mubr.bf16.mxu0 %v505
      %641 = vmatmul.mubr.bf16.gmra.mxu0 %v504
      %v642 = vpop.f32.mrf.mxu0
      %v643 = vadd.f32 0.0, %v642
      %v644 = vpop.f32.mrf.mxu0
      %v645 = vpop.f32.mrf.mxu0
      %v646 = vadd.f32 0.0, %v645
      %v647 = vpop.f32.mrf.mxu0
      %648 = vmatprep.mubr.bf16.mxu0 %v507
      %649 = vmatmul.mubr.bf16.gmra.mxu0 %v506
      %v650 = vpop.f32.mrf.mxu0
      %v651 = vadd.f32 0.0, %v650
      %v652 = vpop.f32.mrf.mxu0
      %v653 = vpop.f32.mrf.mxu0
      %v654 = vadd.f32 0.0, %v653
      %v655 = vpop.f32.mrf.mxu0
      %656 = vmatprep.mubr.bf16.mxu0 %v509
      %657 = vmatmul.mubr.bf16.gmra.mxu0 %v508
      %v658 = vpop.f32.mrf.mxu0
      %v659 = vadd.f32 0.0, %v658
      %v660 = vpop.f32.mrf.mxu0
      %v661 = vpop.f32.mrf.mxu0
      %v662 = vadd.f32 0.0, %v661
      %v663 = vpop.f32.mrf.mxu0
      %664 = vmatprep.mubr.bf16.mxu0 %v511
      %665 = vmatmul.mubr.bf16.gmra.mxu0 %v510
      %v666 = vpop.f32.mrf.mxu0
      %v667 = vadd.f32 0.0, %v666
      %v668 = vpop.f32.mrf.mxu0
      %v669 = vpop.f32.mrf.mxu0
      %v670 = vadd.f32 0.0, %v669
      %v671 = vpop.f32.mrf.mxu0
      %672 = vdwg.mxu0
      %v673 = vadd.f32 %v560, %v611
      %v674 = vadd.f32 %v561, %v614
      %v675 = vadd.f32 %v562, %v619
      %v676 = vadd.f32 %v563, %v622
      %v677 = vadd.f32 %v564, %v627
      %v678 = vadd.f32 %v565, %v630
      %v679 = vadd.f32 %v566, %v635
      %v680 = vadd.f32 %v567, %v638
      %v681 = vadd.f32 %v568, %v643
      %v682 = vadd.f32 %v569, %v646
      %v683 = vadd.f32 %v570, %v651
      %v684 = vadd.f32 %v571, %v654
      %v685 = vadd.f32 %v572, %v659
      %v686 = vadd.f32 %v573, %v662
      %v687 = vadd.f32 %v574, %v667
      %v688 = vadd.f32 %v575, %v670
      %689 = vst [vmem:[#allocation2] sm:$0xff] %v673
      %690 = vst [vmem:[#allocation2 + $0x8] sm:$0xff] %v674
      %691 = vst [vmem:[#allocation2 + $0x10] sm:$0xff] %v675
      %692 = vst [vmem:[#allocation2 + $0x18] sm:$0xff] %v676
      %693 = vst [vmem:[#allocation2 + $0x20] sm:$0xff] %v677
      %694 = vst [vmem:[#allocation2 + $0x28] sm:$0xff] %v678
      %695 = vst [vmem:[#allocation2 + $0x30] sm:$0xff] %v679
      %696 = vst [vmem:[#allocation2 + $0x38] sm:$0xff] %v680
      %697 = vst [vmem:[#allocation2 + $0x40] sm:$0xff] %v681
      %698 = vst [vmem:[#allocation2 + $0x48] sm:$0xff] %v682
      %699 = vst [vmem:[#allocation2 + $0x50] sm:$0xff] %v683
      %700 = vst [vmem:[#allocation2 + $0x58] sm:$0xff] %v684
      %701 = vst [vmem:[#allocation2 + $0x60] sm:$0xff] %v685
      %702 = vst [vmem:[#allocation2 + $0x68] sm:$0xff] %v686
      %703 = vst [vmem:[#allocation2 + $0x70] sm:$0xff] %v687
      %704 = vst [vmem:[#allocation2 + $0x78] sm:$0xff] %v688
      %p705 = scmp.eq.s32.totalorder %s23, 1
      // Predicated region
      $region53: #{gnn_forward.2} parent=47 // pred_check
        %p706 = pneg %p705
      $region54: #{gnn_forward.2} parent=47 // pred_check_branch
        %708 = sbr.rel (%p706) target = $region56
      $region55: #{gnn_forward.2} parent=47 // pred_region
        %v709 = vld [vmem:[#allocation2] sm:$0xff]
        %v710 = vld [vmem:[#allocation2 + $0x8] sm:$0xff]
        %v711 = vld [vmem:[#allocation2 + $0x10] sm:$0xff]
        %v712 = vld [vmem:[#allocation2 + $0x18] sm:$0xff]
        %v713 = vld [vmem:[#allocation2 + $0x20] sm:$0xff]
        %v714 = vld [vmem:[#allocation2 + $0x28] sm:$0xff]
        %v715 = vld [vmem:[#allocation2 + $0x30] sm:$0xff]
        %v716 = vld [vmem:[#allocation2 + $0x38] sm:$0xff]
        %v717 = vld [vmem:[#allocation2 + $0x40] sm:$0xff]
        %v718 = vld [vmem:[#allocation2 + $0x48] sm:$0xff]
        %v719 = vld [vmem:[#allocation2 + $0x50] sm:$0xff]
        %v720 = vld [vmem:[#allocation2 + $0x58] sm:$0xff]
        %v721 = vld [vmem:[#allocation2 + $0x60] sm:$0xff]
        %v722 = vld [vmem:[#allocation2 + $0x68] sm:$0xff]
        %v723 = vld [vmem:[#allocation2 + $0x70] sm:$0xff]
        %v724 = vld [vmem:[#allocation2 + $0x78] sm:$0xff]
        %v725 = vld [vmem:[%s327] sm:$0xff]
        %v726 = vld [vmem:[%s327 + $0x8] sm:$0xff]
        %v727 = vld [vmem:[%s327 + $0x10] sm:$0xff]
        %v728 = vld [vmem:[%s327 + $0x18] sm:$0xff]
        %v729 = vld [vmem:[%s327 + $0x20] sm:$0xff]
        %v730 = vld [vmem:[%s327 + $0x28] sm:$0xff]
        %v731 = vld [vmem:[%s327 + $0x30] sm:$0xff]
        %v732 = vld [vmem:[%s327 + $0x38] sm:$0xff]
        %v733 = vld [vmem:[%s327 + $0x40] sm:$0xff]
        %v734 = vld [vmem:[%s327 + $0x48] sm:$0xff]
        %v735 = vld [vmem:[%s327 + $0x50] sm:$0xff]
        %v736 = vld [vmem:[%s327 + $0x58] sm:$0xff]
        %v737 = vld [vmem:[%s327 + $0x60] sm:$0xff]
        %v738 = vld [vmem:[%s327 + $0x68] sm:$0xff]
        %v739 = vld [vmem:[%s327 + $0x70] sm:$0xff]
        %v740 = vld [vmem:[%s327 + $0x78] sm:$0xff]
        %v741 = vadd.f32 %v709, %v725
        %v742 = vadd.f32 %v710, %v726
        %v743 = vadd.f32 %v711, %v727
        %v744 = vadd.f32 %v712, %v728
        %v745 = vadd.f32 %v713, %v729
        %v746 = vadd.f32 %v714, %v730
        %v747 = vadd.f32 %v715, %v731
        %v748 = vadd.f32 %v716, %v732
        %v749 = vadd.f32 %v717, %v733
        %v750 = vadd.f32 %v718, %v734
        %v751 = vadd.f32 %v719, %v735
        %v752 = vadd.f32 %v720, %v736
        %v753 = vadd.f32 %v721, %v737
        %v754 = vadd.f32 %v722, %v738
        %v755 = vadd.f32 %v723, %v739
        %v756 = vadd.f32 %v724, %v740
        %v757 = vpack.c.bf16 %v742, %v741
        %v758 = vpack.c.bf16 %v744, %v743
        %v759 = vpack.c.bf16 %v746, %v745
        %v760 = vpack.c.bf16 %v748, %v747
        %v761 = vpack.c.bf16 %v750, %v749
        %v762 = vpack.c.bf16 %v752, %v751
        %v763 = vpack.c.bf16 %v754, %v753
        %v764 = vpack.c.bf16 %v756, %v755
        %v765 = vld [vmem:[%s3] sm:$0xff]
        %v766 = vld [vmem:[%s3 + $0x8] sm:$0xff]
        %v767 = vld [vmem:[%s3 + $0x10] sm:$0xff]
        %v768 = vld [vmem:[%s3 + $0x18] sm:$0xff]
        %v769 = vld [vmem:[%s3 + $0x20] sm:$0xff]
        %v770 = vld [vmem:[%s3 + $0x28] sm:$0xff]
        %v771 = vld [vmem:[%s3 + $0x30] sm:$0xff]
        %v772 = vld [vmem:[%s3 + $0x38] sm:$0xff]
        %v773 = vld [vmem:[%s3 + $0x40] sm:$0xff]
        %v774 = vld [vmem:[%s3 + $0x48] sm:$0xff]
        %v775 = vld [vmem:[%s3 + $0x50] sm:$0xff]
        %v776 = vld [vmem:[%s3 + $0x58] sm:$0xff]
        %v777 = vld [vmem:[%s3 + $0x60] sm:$0xff]
        %v778 = vld [vmem:[%s3 + $0x68] sm:$0xff]
        %v779 = vld [vmem:[%s3 + $0x70] sm:$0xff]
        %v780 = vld [vmem:[%s3 + $0x78] sm:$0xff]
        %v781 = vld [vmem:[%s3 + $0x80] sm:$0xff]
        %v782 = vld [vmem:[%s3 + $0x88] sm:$0xff]
        %v783 = vld [vmem:[%s3 + $0x90] sm:$0xff]
        %v784 = vld [vmem:[%s3 + $0x98] sm:$0xff]
        %v785 = vld [vmem:[%s3 + $0xa0] sm:$0xff]
        %v786 = vld [vmem:[%s3 + $0xa8] sm:$0xff]
        %v787 = vld [vmem:[%s3 + $0xb0] sm:$0xff]
        %v788 = vld [vmem:[%s3 + $0xb8] sm:$0xff]
        %v789 = vld [vmem:[%s3 + $0xc0] sm:$0xff]
        %v790 = vld [vmem:[%s3 + $0xc8] sm:$0xff]
        %v791 = vld [vmem:[%s3 + $0xd0] sm:$0xff]
        %v792 = vld [vmem:[%s3 + $0xd8] sm:$0xff]
        %v793 = vld [vmem:[%s3 + $0xe0] sm:$0xff]
        %v794 = vld [vmem:[%s3 + $0xe8] sm:$0xff]
        %v795 = vld [vmem:[%s3 + $0xf0] sm:$0xff]
        %v796 = vld [vmem:[%s3 + $0xf8] sm:$0xff]
        %v797 = vpack.c.bf16 %v767, %v765
        %v798 = vpack.c.bf16 %v768, %v766
        %v799 = vpack.c.bf16 %v771, %v769
        %v800 = vpack.c.bf16 %v772, %v770
        %v801 = vpack.c.bf16 %v775, %v773
        %v802 = vpack.c.bf16 %v776, %v774
        %v803 = vpack.c.bf16 %v779, %v777
        %v804 = vpack.c.bf16 %v780, %v778
        %v805 = vpack.c.bf16 %v783, %v781
        %v806 = vpack.c.bf16 %v784, %v782
        %v807 = vpack.c.bf16 %v787, %v785
        %v808 = vpack.c.bf16 %v788, %v786
        %v809 = vpack.c.bf16 %v791, %v789
        %v810 = vpack.c.bf16 %v792, %v790
        %v811 = vpack.c.bf16 %v795, %v793
        %v812 = vpack.c.bf16 %v796, %v794
        %v813 = vld [vmem:[%s4] sm:$0x3]
        %v815 = vlaneseq
        %v816 = vshrl.u32 %v815, 7
        %v817 = vsub.s32 0, %v816
        %v818 = vrot.slane %v813, %v817
        %v819 = vlaneseq
        %v820 = vshrl.u32 %v819, 7
        %v821 = vsub.s32 1, %v820
        %v822 = vrot.slane %v813, %v821
        %825 = vmatprep.subr.bf16.mxu0 %v812
        %826 = vmatpush1.bf16.msra.mxu0 %v811
        %827 = vmatprep.subr.bf16.mxu0 %v810
        %828 = vmatpush1.bf16.msra.mxu0 %v809
        %829 = vmatprep.subr.bf16.mxu0 %v808
        %830 = vmatpush1.bf16.msra.mxu0 %v807
        %831 = vmatprep.subr.bf16.mxu0 %v806
        %832 = vmatpush1.bf16.msra.mxu0 %v805
        %833 = vmatprep.subr.bf16.mxu0 %v804
        %834 = vmatpush1.bf16.msra.mxu0 %v803
        %835 = vmatprep.subr.bf16.mxu0 %v802
        %836 = vmatpush1.bf16.msra.mxu0 %v801
        %837 = vmatprep.subr.bf16.mxu0 %v800
        %838 = vmatpush1.bf16.msra.mxu0 %v799
        %839 = vmatprep.subr.bf16.mxu0 %v798
        %840 = vmatpush1.bf16.msra.mxu0 %v797
        %841 = vmatprep.subr.bf16.mxu0 0
        %842 = vmatpush2.bf16.msra.mxu0 0
        %843 = vmatprep.subr.bf16.mxu0 0
        %844 = vmatpush2.bf16.msra.mxu0 0
        %845 = vmatprep.subr.bf16.mxu0 0
        %846 = vmatpush2.bf16.msra.mxu0 0
        %847 = vmatprep.subr.bf16.mxu0 0
        %848 = vmatpush2.bf16.msra.mxu0 0
        %849 = vmatprep.subr.bf16.mxu0 0
        %850 = vmatpush2.bf16.msra.mxu0 0
        %851 = vmatprep.subr.bf16.mxu0 0
        %852 = vmatpush2.bf16.msra.mxu0 0
        %853 = vmatprep.subr.bf16.mxu0 0
        %854 = vmatpush2.bf16.msra.mxu0 0
        %855 = vmatprep.subr.bf16.mxu0 0
        %856 = vmatpush2.bf16.msra.mxu0 0
        %857 = vmatprep.mubr.bf16.mxu0 0
        %858 = vmatmul.mubr.bf16.gmra.mxu0 %v757
        %v859 = vpop.f32.mrf.mxu0
        %v860 = vadd.f32 %v818, %v859
        %v861 = vpop.f32.mrf.mxu0
        %v862 = vadd.f32 %v822, %v861
        %v863 = vpop.f32.mrf.mxu0
        %v864 = vadd.f32 %v818, %v863
        %v865 = vpop.f32.mrf.mxu0
        %v866 = vadd.f32 %v822, %v865
        %867 = vmatprep.mubr.bf16.mxu0 0
        %868 = vmatmul.mubr.bf16.gmra.mxu0 %v758
        %v869 = vpop.f32.mrf.mxu0
        %v870 = vadd.f32 %v818, %v869
        %v871 = vpop.f32.mrf.mxu0
        %v872 = vadd.f32 %v822, %v871
        %v873 = vpop.f32.mrf.mxu0
        %v874 = vadd.f32 %v818, %v873
        %v875 = vpop.f32.mrf.mxu0
        %v876 = vadd.f32 %v822, %v875
        %877 = vmatprep.mubr.bf16.mxu0 0
        %878 = vmatmul.mubr.bf16.gmra.mxu0 %v759
        %v879 = vpop.f32.mrf.mxu0
        %v880 = vadd.f32 %v818, %v879
        %v881 = vpop.f32.mrf.mxu0
        %v882 = vadd.f32 %v822, %v881
        %v883 = vpop.f32.mrf.mxu0
        %v884 = vadd.f32 %v818, %v883
        %v885 = vpop.f32.mrf.mxu0
        %v886 = vadd.f32 %v822, %v885
        %887 = vmatprep.mubr.bf16.mxu0 0
        %888 = vmatmul.mubr.bf16.gmra.mxu0 %v760
        %v889 = vpop.f32.mrf.mxu0
        %v890 = vadd.f32 %v818, %v889
        %v891 = vpop.f32.mrf.mxu0
        %v892 = vadd.f32 %v822, %v891
        %v893 = vpop.f32.mrf.mxu0
        %v894 = vadd.f32 %v818, %v893
        %v895 = vpop.f32.mrf.mxu0
        %v896 = vadd.f32 %v822, %v895
        %897 = vmatprep.mubr.bf16.mxu0 0
        %898 = vmatmul.mubr.bf16.gmra.mxu0 %v761
        %v899 = vpop.f32.mrf.mxu0
        %v900 = vadd.f32 %v818, %v899
        %v901 = vpop.f32.mrf.mxu0
        %v902 = vadd.f32 %v822, %v901
        %v903 = vpop.f32.mrf.mxu0
        %v904 = vadd.f32 %v818, %v903
        %v905 = vpop.f32.mrf.mxu0
        %v906 = vadd.f32 %v822, %v905
        %907 = vmatprep.mubr.bf16.mxu0 0
        %908 = vmatmul.mubr.bf16.gmra.mxu0 %v762
        %v909 = vpop.f32.mrf.mxu0
        %v910 = vadd.f32 %v818, %v909
        %v911 = vpop.f32.mrf.mxu0
        %v912 = vadd.f32 %v822, %v911
        %v913 = vpop.f32.mrf.mxu0
        %v914 = vadd.f32 %v818, %v913
        %v915 = vpop.f32.mrf.mxu0
        %v916 = vadd.f32 %v822, %v915
        %917 = vmatprep.mubr.bf16.mxu0 0
        %918 = vmatmul.mubr.bf16.gmra.mxu0 %v763
        %v919 = vpop.f32.mrf.mxu0
        %v920 = vadd.f32 %v818, %v919
        %v921 = vpop.f32.mrf.mxu0
        %v922 = vadd.f32 %v822, %v921
        %v923 = vpop.f32.mrf.mxu0
        %v924 = vadd.f32 %v818, %v923
        %v925 = vpop.f32.mrf.mxu0
        %v926 = vadd.f32 %v822, %v925
        %927 = vmatprep.mubr.bf16.mxu0 0
        %928 = vmatmul.mubr.bf16.gmra.mxu0 %v764
        %v929 = vpop.f32.mrf.mxu0
        %v930 = vadd.f32 %v818, %v929
        %v931 = vpop.f32.mrf.mxu0
        %v932 = vadd.f32 %v822, %v931
        %v933 = vpop.f32.mrf.mxu0
        %v934 = vadd.f32 %v818, %v933
        %v935 = vpop.f32.mrf.mxu0
        %v936 = vadd.f32 %v822, %v935
        %937 = vdwg.mxu0
        %v938 = vmax.f32 %v860, 0.0
        %v939 = vmax.f32 %v862, 0.0
        %v940 = vmax.f32 %v864, 0.0
        %v941 = vmax.f32 %v866, 0.0
        %v942 = vmax.f32 %v870, 0.0
        %v943 = vmax.f32 %v872, 0.0
        %v944 = vmax.f32 %v874, 0.0
        %v945 = vmax.f32 %v876, 0.0
        %v946 = vmax.f32 %v880, 0.0
        %v947 = vmax.f32 %v882, 0.0
        %v948 = vmax.f32 %v884, 0.0
        %v949 = vmax.f32 %v886, 0.0
        %v950 = vmax.f32 %v890, 0.0
        %v951 = vmax.f32 %v892, 0.0
        %v952 = vmax.f32 %v894, 0.0
        %v953 = vmax.f32 %v896, 0.0
        %v954 = vmax.f32 %v900, 0.0
        %v955 = vmax.f32 %v902, 0.0
        %v956 = vmax.f32 %v904, 0.0
        %v957 = vmax.f32 %v906, 0.0
        %v958 = vmax.f32 %v910, 0.0
        %v959 = vmax.f32 %v912, 0.0
        %v960 = vmax.f32 %v914, 0.0
        %v961 = vmax.f32 %v916, 0.0
        %v962 = vmax.f32 %v920, 0.0
        %v963 = vmax.f32 %v922, 0.0
        %v964 = vmax.f32 %v924, 0.0
        %v965 = vmax.f32 %v926, 0.0
        %v966 = vmax.f32 %v930, 0.0
        %v967 = vmax.f32 %v932, 0.0
        %v968 = vmax.f32 %v934, 0.0
        %v969 = vmax.f32 %v936, 0.0
        %v970 = vpack.c.bf16 %v940, %v938
        %v971 = vpack.c.bf16 %v941, %v939
        %v972 = vpack.c.bf16 %v944, %v942
        %v973 = vpack.c.bf16 %v945, %v943
        %v974 = vpack.c.bf16 %v948, %v946
        %v975 = vpack.c.bf16 %v949, %v947
        %v976 = vpack.c.bf16 %v952, %v950
        %v977 = vpack.c.bf16 %v953, %v951
        %v978 = vpack.c.bf16 %v956, %v954
        %v979 = vpack.c.bf16 %v957, %v955
        %v980 = vpack.c.bf16 %v960, %v958
        %v981 = vpack.c.bf16 %v961, %v959
        %v982 = vpack.c.bf16 %v964, %v962
        %v983 = vpack.c.bf16 %v965, %v963
        %v984 = vpack.c.bf16 %v968, %v966
        %v985 = vpack.c.bf16 %v969, %v967
        %v986 = vld [vmem:[%s5] sm:$0xff]
        %v987 = vld [vmem:[%s5 + $0x8] sm:$0xff]
        %v988 = vld [vmem:[%s5 + $0x10] sm:$0xff]
        %v989 = vld [vmem:[%s5 + $0x18] sm:$0xff]
        %v990 = vld [vmem:[%s5 + $0x20] sm:$0xff]
        %v991 = vld [vmem:[%s5 + $0x28] sm:$0xff]
        %v992 = vld [vmem:[%s5 + $0x30] sm:$0xff]
        %v993 = vld [vmem:[%s5 + $0x38] sm:$0xff]
        %v994 = vld [vmem:[%s5 + $0x40] sm:$0xff]
        %v995 = vld [vmem:[%s5 + $0x48] sm:$0xff]
        %v996 = vld [vmem:[%s5 + $0x50] sm:$0xff]
        %v997 = vld [vmem:[%s5 + $0x58] sm:$0xff]
        %v998 = vld [vmem:[%s5 + $0x60] sm:$0xff]
        %v999 = vld [vmem:[%s5 + $0x68] sm:$0xff]
        %v1000 = vld [vmem:[%s5 + $0x70] sm:$0xff]
        %v1001 = vld [vmem:[%s5 + $0x78] sm:$0xff]
        %v1002 = vld [vmem:[%s5 + $0x80] sm:$0xff]
        %v1003 = vld [vmem:[%s5 + $0x88] sm:$0xff]
        %v1004 = vld [vmem:[%s5 + $0x90] sm:$0xff]
        %v1005 = vld [vmem:[%s5 + $0x98] sm:$0xff]
        %v1006 = vld [vmem:[%s5 + $0xa0] sm:$0xff]
        %v1007 = vld [vmem:[%s5 + $0xa8] sm:$0xff]
        %v1008 = vld [vmem:[%s5 + $0xb0] sm:$0xff]
        %v1009 = vld [vmem:[%s5 + $0xb8] sm:$0xff]
        %v1010 = vld [vmem:[%s5 + $0xc0] sm:$0xff]
        %v1011 = vld [vmem:[%s5 + $0xc8] sm:$0xff]
        %v1012 = vld [vmem:[%s5 + $0xd0] sm:$0xff]
        %v1013 = vld [vmem:[%s5 + $0xd8] sm:$0xff]
        %v1014 = vld [vmem:[%s5 + $0xe0] sm:$0xff]
        %v1015 = vld [vmem:[%s5 + $0xe8] sm:$0xff]
        %v1016 = vld [vmem:[%s5 + $0xf0] sm:$0xff]
        %v1017 = vld [vmem:[%s5 + $0xf8] sm:$0xff]
        %v1018 = vpack.c.bf16 %v987, %v986
        %v1019 = vpack.c.bf16 %v989, %v988
        %v1020 = vpack.c.bf16 %v991, %v990
        %v1021 = vpack.c.bf16 %v993, %v992
        %v1022 = vpack.c.bf16 %v995, %v994
        %v1023 = vpack.c.bf16 %v997, %v996
        %v1024 = vpack.c.bf16 %v999, %v998
        %v1025 = vpack.c.bf16 %v1001, %v1000
        %v1026 = vpack.c.bf16 %v1003, %v1002
        %v1027 = vpack.c.bf16 %v1005, %v1004
        %v1028 = vpack.c.bf16 %v1007, %v1006
        %v1029 = vpack.c.bf16 %v1009, %v1008
        %v1030 = vpack.c.bf16 %v1011, %v1010
        %v1031 = vpack.c.bf16 %v1013, %v1012
        %v1032 = vpack.c.bf16 %v1015, %v1014
        %v1033 = vpack.c.bf16 %v1017, %v1016
        %v1034 = vld [vmem:[%s6] sm:$0x1]
        %v1036 = vlaneseq
        %v1037 = vshrl.u32 %v1036, 7
        %v1038 = vsub.s32 0, %v1037
        %v1039 = vrot.slane %v1034, %v1038
        %1041 = vmatprep.subr.bf16.mxu0 0
        %1042 = vmatpush1.bf16.msra.mxu0 %v1025
        %1043 = vmatprep.subr.bf16.mxu0 0
        %1044 = vmatpush1.bf16.msra.mxu0 %v1024
        %1045 = vmatprep.subr.bf16.mxu0 0
        %1046 = vmatpush1.bf16.msra.mxu0 %v1023
        %1047 = vmatprep.subr.bf16.mxu0 0
        %1048 = vmatpush1.bf16.msra.mxu0 %v1022
        %1049 = vmatprep.subr.bf16.mxu0 0
        %1050 = vmatpush1.bf16.msra.mxu0 %v1021
        %1051 = vmatprep.subr.bf16.mxu0 0
        %1052 = vmatpush1.bf16.msra.mxu0 %v1020
        %1053 = vmatprep.subr.bf16.mxu0 0
        %1054 = vmatpush1.bf16.msra.mxu0 %v1019
        %1055 = vmatprep.subr.bf16.mxu0 0
        %1056 = vmatpush1.bf16.msra.mxu0 %v1018
        %1057 = vmatprep.subr.bf16.mxu0 0
        %1058 = vmatpush2.bf16.msra.mxu0 %v1033
        %1059 = vmatprep.subr.bf16.mxu0 0
        %1060 = vmatpush2.bf16.msra.mxu0 %v1032
        %1061 = vmatprep.subr.bf16.mxu0 0
        %1062 = vmatpush2.bf16.msra.mxu0 %v1031
        %1063 = vmatprep.subr.bf16.mxu0 0
        %1064 = vmatpush2.bf16.msra.mxu0 %v1030
        %1065 = vmatprep.subr.bf16.mxu0 0
        %1066 = vmatpush2.bf16.msra.mxu0 %v1029
        %1067 = vmatprep.subr.bf16.mxu0 0
        %1068 = vmatpush2.bf16.msra.mxu0 %v1028
        %1069 = vmatprep.subr.bf16.mxu0 0
        %1070 = vmatpush2.bf16.msra.mxu0 %v1027
        %1071 = vmatprep.subr.bf16.mxu0 0
        %1072 = vmatpush2.bf16.msra.mxu0 %v1026
        %1073 = vmatprep.mubr.bf16.mxu0 %v971
        %1074 = vmatmul.mubr.bf16.gmra.mxu0 %v970
        %v1075 = vpop.f32.mrf.mxu0
        %v1076 = vadd.f32 %v1039, %v1075
        %v1077 = vpop.f32.mrf.mxu0
        %v1078 = vpop.f32.mrf.mxu0
        %v1079 = vadd.f32 %v1039, %v1078
        %v1080 = vpop.f32.mrf.mxu0
        %1081 = vmatprep.mubr.bf16.mxu0 %v973
        %1082 = vmatmul.mubr.bf16.gmra.mxu0 %v972
        %v1083 = vpop.f32.mrf.mxu0
        %v1084 = vadd.f32 %v1039, %v1083
        %v1085 = vpop.f32.mrf.mxu0
        %v1086 = vpop.f32.mrf.mxu0
        %v1087 = vadd.f32 %v1039, %v1086
        %v1088 = vpop.f32.mrf.mxu0
        %1089 = vmatprep.mubr.bf16.mxu0 %v975
        %1090 = vmatmul.mubr.bf16.gmra.mxu0 %v974
        %v1091 = vpop.f32.mrf.mxu0
        %v1092 = vadd.f32 %v1039, %v1091
        %v1093 = vpop.f32.mrf.mxu0
        %v1094 = vpop.f32.mrf.mxu0
        %v1095 = vadd.f32 %v1039, %v1094
        %v1096 = vpop.f32.mrf.mxu0
        %1097 = vmatprep.mubr.bf16.mxu0 %v977
        %1098 = vmatmul.mubr.bf16.gmra.mxu0 %v976
        %v1099 = vpop.f32.mrf.mxu0
        %v1100 = vadd.f32 %v1039, %v1099
        %v1101 = vpop.f32.mrf.mxu0
        %v1102 = vpop.f32.mrf.mxu0
        %v1103 = vadd.f32 %v1039, %v1102
        %v1104 = vpop.f32.mrf.mxu0
        %1105 = vmatprep.mubr.bf16.mxu0 %v979
        %1106 = vmatmul.mubr.bf16.gmra.mxu0 %v978
        %v1107 = vpop.f32.mrf.mxu0
        %v1108 = vadd.f32 %v1039, %v1107
        %v1109 = vpop.f32.mrf.mxu0
        %v1110 = vpop.f32.mrf.mxu0
        %v1111 = vadd.f32 %v1039, %v1110
        %v1112 = vpop.f32.mrf.mxu0
        %1113 = vmatprep.mubr.bf16.mxu0 %v981
        %1114 = vmatmul.mubr.bf16.gmra.mxu0 %v980
        %v1115 = vpop.f32.mrf.mxu0
        %v1116 = vadd.f32 %v1039, %v1115
        %v1117 = vpop.f32.mrf.mxu0
        %v1118 = vpop.f32.mrf.mxu0
        %v1119 = vadd.f32 %v1039, %v1118
        %v1120 = vpop.f32.mrf.mxu0
        %1121 = vmatprep.mubr.bf16.mxu0 %v983
        %1122 = vmatmul.mubr.bf16.gmra.mxu0 %v982
        %v1123 = vpop.f32.mrf.mxu0
        %v1124 = vadd.f32 %v1039, %v1123
        %v1125 = vpop.f32.mrf.mxu0
        %v1126 = vpop.f32.mrf.mxu0
        %v1127 = vadd.f32 %v1039, %v1126
        %v1128 = vpop.f32.mrf.mxu0
        %1129 = vmatprep.mubr.bf16.mxu0 %v985
        %1130 = vmatmul.mubr.bf16.gmra.mxu0 %v984
        %v1131 = vpop.f32.mrf.mxu0
        %v1132 = vadd.f32 %v1039, %v1131
        %v1133 = vpop.f32.mrf.mxu0
        %v1134 = vpop.f32.mrf.mxu0
        %v1135 = vadd.f32 %v1039, %v1134
        %v1136 = vpop.f32.mrf.mxu0
        %1137 = vdwg.mxu0
        %v1138 = vmax.f32 %v1076, 0.0
        %v1139 = vmax.f32 %v1079, 0.0
        %v1140 = vmax.f32 %v1084, 0.0
        %v1141 = vmax.f32 %v1087, 0.0
        %v1142 = vmax.f32 %v1092, 0.0
        %v1143 = vmax.f32 %v1095, 0.0
        %v1144 = vmax.f32 %v1100, 0.0
        %v1145 = vmax.f32 %v1103, 0.0
        %v1146 = vmax.f32 %v1108, 0.0
        %v1147 = vmax.f32 %v1111, 0.0
        %v1148 = vmax.f32 %v1116, 0.0
        %v1149 = vmax.f32 %v1119, 0.0
        %v1150 = vmax.f32 %v1124, 0.0
        %v1151 = vmax.f32 %v1127, 0.0
        %v1152 = vmax.f32 %v1132, 0.0
        %v1153 = vmax.f32 %v1135, 0.0
        %1154 = vst [vmem:[%s333] sm:$0xff] %v1138
        %1155 = vst [vmem:[%s333 + $0x8] sm:$0xff] %v1139
        %1156 = vst [vmem:[%s333 + $0x10] sm:$0xff] %v1140
        %1157 = vst [vmem:[%s333 + $0x18] sm:$0xff] %v1141
        %1158 = vst [vmem:[%s333 + $0x20] sm:$0xff] %v1142
        %1159 = vst [vmem:[%s333 + $0x28] sm:$0xff] %v1143
        %1160 = vst [vmem:[%s333 + $0x30] sm:$0xff] %v1144
        %1161 = vst [vmem:[%s333 + $0x38] sm:$0xff] %v1145
        %1162 = vst [vmem:[%s333 + $0x40] sm:$0xff] %v1146
        %1163 = vst [vmem:[%s333 + $0x48] sm:$0xff] %v1147
        %1164 = vst [vmem:[%s333 + $0x50] sm:$0xff] %v1148
        %1165 = vst [vmem:[%s333 + $0x58] sm:$0xff] %v1149
        %1166 = vst [vmem:[%s333 + $0x60] sm:$0xff] %v1150
        %1167 = vst [vmem:[%s333 + $0x68] sm:$0xff] %v1151
        %1168 = vst [vmem:[%s333 + $0x70] sm:$0xff] %v1152
        %1169 = vst [vmem:[%s333 + $0x78] sm:$0xff] %v1153
      $region56: #{gnn_forward.2} parent=47 // pred_fallthru
        _
      %s1170 = smul.u32 16, %s22
      %p1171 = scmp.lt.s32.totalorder %s1170, 31
      %s1172 = scalar_select %p1171, %s1170, 31
      %s1173 = smul.addr %s1172, 8
      %s1174 = scalar_lea.vmem %s7, %s1173
      // Predicated region
      $region57: #{gnn_forward.2} parent=47 // pred_check
        %p1175 = pneg %p210
      $region58: #{gnn_forward.2} parent=47 // pred_check_branch
        %1177 = sbr.rel (%p1175) target = $region60
      $region59: #{gnn_forward.2} parent=47 // pred_region
        %s1178 = smul.u32 16, %s22
      $region60: #{gnn_forward.2} parent=47 // pred_fallthru
        _
    $region48: #{gnn_forward.2} parent=5 // pred_fallthru
      _
    %p1179 = scmp.le.s32.totalorder 2, %s13
    // Predicated region
    $region61: #{gnn_forward.2} parent=5 // pred_check
      %p1180 = pneg %p1179
    $region62: #{gnn_forward.2} parent=5 // pred_check_branch
      %1182 = sbr.rel (%p1180) target = $region64
    $region63: #{gnn_forward.2} parent=5 // pred_region
      %s1183 = ssub.s32 %s13, 2
      // Predicated region
      $region65: #{gnn_forward.2} parent=63 // pred_check
        %p1184 = pneg %p216
      $region66: #{gnn_forward.2} parent=63 // pred_check_branch
        %1186 = sbr.rel (%p1184) target = $region68
      $region67: #{gnn_forward.2} parent=63 // pred_region
        %s1187 = smul.u32 16, %s24
        %p1188 = scmp.lt.s32.totalorder %s1187, 31
        %s1189 = scalar_select %p1188, %s1187, 31
        %s1190 = smul.addr %s1189, 8
        %s1191 = scalar_lea.vmem %s7, %s1190
      $region68: #{gnn_forward.2} parent=63 // pred_fallthru
        _
    $region64: #{gnn_forward.2} parent=5 // pred_fallthru
      _
  $region6: #{gnn_forward.2} parent=0 // loop_footer
    %s17 = sadd.s32 1, %s13
  $region7: #{gnn_forward.2} parent=0 // loop_footer_branch
    %12 = sbr.rel target = $region3
  $region8: #{gnn_forward.2} parent=0 // loop_exit
    _

</llo_original>
